<compile_context>
chip_gen: v7x
topology: tpu7x:2x2x1
jax: 0.10.0
libtpu: 0.0.40
codegen_flags: <defaults>
</compile_context>

<pallas_src>
import math

import jax
import jax.numpy as jnp
from jax.experimental import pallas as pl
from jax.experimental.pallas import tpu as pltpu


def _round_up(a: int, b: int) -> int:
    return ((a + b - 1) // b) * b


def _make_mfn_kernel(n_bil: int, hidden: int):
    """Unrolled MFN kernel, transposed layout: activations are (hidden, TM)."""

    def kernel(x_ref, cp_ref, wf_ref, w1_ref, wout_ref, bout_ref, o_ref):
        x = x_ref[...]                         # (in_dim + 1, TM)  last row == 1.0
        cp = cp_ref[...]                       # (n_bil*hidden, 1) per-batch code proj

        # All Fourier filters in one MXU pass + one EUP sin pass (bias folded in).
        filt_all = jnp.sin(
            jnp.dot(wf_ref[...], x, preferred_element_type=jnp.float32)
        )                                      # (n_bil*hidden, TM)

        # Layer 0: previous `out` is exactly zero, so lin == code_proj_0.
        out = filt_all[0:hidden, :] * cp[0:hidden, :]          # (hidden, TM)

        w1_all = w1_ref[...]                   # ((n_bil-1)*hidden, hidden)
        for l in range(1, n_bil):
            w1_l = w1_all[(l - 1) * hidden:l * hidden, :]       # (hidden, hidden)
            cp_l = cp[l * hidden:(l + 1) * hidden, :]           # (hidden, 1)
            lin = jnp.dot(w1_l, out, preferred_element_type=jnp.float32) + cp_l
            out = filt_all[l * hidden:(l + 1) * hidden, :] * lin

        z = jnp.dot(wout_ref[...], out, preferred_element_type=jnp.float32) \
            + bout_ref[...]
        o_ref[...] = z                         # (1, TM) lane-dense store

    return kernel


def init_params(key, in_dim, code_dim, hidden_dim, nlayers):
    """Deterministic synthetic init matching the shapes in MFNBase.__init__."""
    n_bil = nlayers + 1
    keys = jax.random.split(key, 5 * n_bil + 2)
    ki = iter(range(len(keys)))
    params = []
    for layer in range(n_bil):
        d1 = in_dim if layer == 0 else hidden_dim
        wf = jax.random.normal(keys[next(ki)], (hidden_dim, in_dim), jnp.float32)
        bf = jax.random.uniform(keys[next(ki)], (hidden_dim,), jnp.float32,
                                -math.pi, math.pi)
        b1_bound = 1.0 / math.sqrt(d1)
        b2_bound = 1.0 / math.sqrt(code_dim)
        w1 = jax.random.uniform(keys[next(ki)], (hidden_dim, d1), jnp.float32,
                                -b1_bound, b1_bound)
        w2 = jax.random.uniform(keys[next(ki)], (hidden_dim, code_dim), jnp.float32,
                                -b2_bound, b2_bound)
        b = jax.random.uniform(keys[next(ki)], (hidden_dim,), jnp.float32,
                               -b1_bound, b1_bound)
        params.append(dict(wf=wf, bf=bf, w1=w1, w2=w2, b=b))
    ob = 1.0 / math.sqrt(hidden_dim)
    wout = jax.random.uniform(keys[next(ki)], (1, hidden_dim), jnp.float32, -ob, ob)
    bout = jax.random.uniform(keys[next(ki)], (1,), jnp.float32, -ob, ob)
    return params, wout, bout


def mfn_forward(x, code, params, wout, bout, *, tile_m=512):
    """
    x:    (B, N, 1, in_dim)
    code: (B, 1, 1, code_dim)    (broadcast over points, as in DINo)
    returns (out, x) with out: (B, N, 1)  == output_linear(...)[..., 0]
    """
    B, N, S, in_dim = x.shape
    code_dim = code.shape[-1]
    hidden = params[0]["wf"].shape[0]
    n_bil = len(params)

    # --- row tiling: rows go on the LANE axis; pad instead of asserting ---------
    R = N * S
    tile_rows = min(_round_up(tile_m, 128), _round_up(R, 128))
    rows_pad = _round_up(R, tile_rows)
    n_tiles = rows_pad // tile_rows

    # x -> (B, in_dim + 1, rows_pad): transposed, lane-dense rows, ones row appended
    # so the Fourier bias bf folds into the filter matmul.
    x_t = jnp.transpose(x.reshape(B, R, in_dim), (0, 2, 1))          # (B, in_dim, R)
    if rows_pad != R:
        x_t = jnp.pad(x_t, ((0, 0), (0, 0), (0, rows_pad - R)))
    ones_row = jnp.ones((B, 1, rows_pad), jnp.float32)
    x_aug = jnp.concatenate([x_t.astype(jnp.float32), ones_row], axis=1)

    # --- hoist the per-batch code projection:  cp[b, l] = code[b] @ W2_l^T + b_l -
    code_flat = code.reshape(B, code_dim).astype(jnp.float32)
    w2_stack = jnp.stack([p["w2"] for p in params], axis=0)           # (n_bil, h, code_dim)
    b_stack = jnp.stack([p["b"] for p in params], axis=0)             # (n_bil, h)
    cp = jnp.einsum("bc,lhc->blh", code_flat, w2_stack) + b_stack[None]
    code_proj = cp.reshape(B, n_bil * hidden, 1)                      # column per batch

    # --- pack parameters into a few stacked slabs ------------------------------
    wf_aug = jnp.concatenate(
        [jnp.concatenate([p["wf"], p["bf"].reshape(-1, 1)], axis=1) for p in params],
        axis=0,
    )                                                                 # (n_bil*h, in_dim+1)
    if n_bil > 1:
        w1_stack = jnp.concatenate([p["w1"] for p in params[1:]], axis=0)  # ((n_bil-1)*h, h)
    else:
        w1_stack = jnp.zeros((hidden, hidden), jnp.float32)                # unused dummy
    wout_a = wout.astype(jnp.float32)                                 # (1, hidden)
    bout_a = bout.reshape(1, 1).astype(jnp.float32)

    kernel = _make_mfn_kernel(n_bil, hidden)

    grid = (B, n_tiles)
    out_padded = pl.pallas_call(
        kernel,
        out_shape=jax.ShapeDtypeStruct((B, 1, rows_pad), jnp.float32),
        grid_spec=pltpu.PrefetchScalarGridSpec(
            num_scalar_prefetch=0,
            grid=grid,
            in_specs=[
                # per-tile inputs
                pl.BlockSpec((None, in_dim + 1, tile_rows), lambda b, t: (b, 0, t)),
                pl.BlockSpec((None, n_bil * hidden, 1), lambda b, t: (b, 0, 0)),
                # packed parameter slabs (whole-array blocks, constant index -> resident)
                pl.BlockSpec(wf_aug.shape, lambda b, t: (0, 0)),
                pl.BlockSpec(w1_stack.shape, lambda b, t: (0, 0)),
                pl.BlockSpec(wout_a.shape, lambda b, t: (0, 0)),
                pl.BlockSpec(bout_a.shape, lambda b, t: (0, 0)),
            ],
            out_specs=pl.BlockSpec((None, 1, tile_rows), lambda b, t: (b, 0, t)),
        ),
        compiler_params=pltpu.CompilerParams(
            dimension_semantics=("parallel", "parallel")),
    )(x_aug, code_proj, wf_aug, w1_stack, wout_a, bout_a)

    out = out_padded[:, 0, :R].reshape(B, N, S)   # == output_linear(...)[..., 0]
    return out, x


def mfn_reference(x, code, params, wout, bout):
    """Pure-JAX reference mirroring the PyTorch forward exactly."""
    out = x * 0.0
    for p in params:
        filt = jnp.sin(jnp.einsum("...i,hi->...h", x, p["wf"]) + p["bf"])
        lin = (jnp.einsum("...i,hi->...h", out, p["w1"])
               + jnp.einsum("...c,hc->...h", code, p["w2"])
               + p["b"])
        out = filt * lin
    z = jnp.einsum("...h,oh->...o", out, wout) + bout
    return z[..., 0], x


if __name__ == "__main__":
    # Small shapes consistent with MFNBase: x (bs, n_points, state_dim=1, in_dim)
    B, N, S = 2, 128, 1
    in_dim, code_dim, hidden_dim, nlayers = 2, 16, 32, 2

    key = jax.random.PRNGKey(0)
    kx, kc, kp = jax.random.split(key, 3)
    x = jax.random.normal(kx, (B, N, S, in_dim), jnp.float32)
    code = jax.random.normal(kc, (B, 1, 1, code_dim), jnp.float32)

    params, wout, bout = init_params(kp, in_dim, code_dim, hidden_dim, nlayers)

    out, x_back = mfn_forward(x, code, params, wout, bout)
    jax.block_until_ready(out)

    ref_out, _ = mfn_reference(x, code, params, wout, bout)
    assert out.shape == (B, N, S)
    assert jnp.allclose(out, ref_out, atol=1e-4, rtol=1e-4), "mismatch vs reference"

    print("KERNEL_OK")
</pallas_src>

<mosaic_0001>
module attributes {stable_mosaic.version = 11 : i64} {
  func.func @kernel(%arg0: i32, %arg1: i32, %arg2: memref<1x3x128xf32, #tpu.memory_space<vmem>>, %arg3: memref<1x96x1xf32, #tpu.memory_space<vmem>>, %arg4: memref<96x3xf32, #tpu.memory_space<vmem>>, %arg5: memref<64x32xf32, #tpu.memory_space<vmem>>, %arg6: memref<1x32xf32, #tpu.memory_space<vmem>>, %arg7: memref<1x1xf32, #tpu.memory_space<vmem>>, %arg8: memref<1x1x128xf32, #tpu.memory_space<vmem>>) attributes {dimension_semantics = [#tpu.dimension_semantics<parallel>, #tpu.dimension_semantics<parallel>], iteration_bounds = array<i64: 2, 1>, scalar_prefetch = 0 : i64, scratch_operands = 0 : i64, tpu.core_type = #tpu.core_type<tc>, window_params = [{transform_indices = @transform_0, window_bounds = array<i64: 1, 3, 128>}, {transform_indices = @transform_1, window_bounds = array<i64: 1, 96, 1>}, {pipeline_mode = #tpu.pipeline_mode<synchronous>, transform_indices = @transform_2, window_bounds = array<i64: 96, 3>}, {pipeline_mode = #tpu.pipeline_mode<synchronous>, transform_indices = @transform_3, window_bounds = array<i64: 64, 32>}, {pipeline_mode = #tpu.pipeline_mode<synchronous>, transform_indices = @transform_4, window_bounds = array<i64: 1, 32>}, {pipeline_mode = #tpu.pipeline_mode<synchronous>, transform_indices = @transform_5, window_bounds = array<i64: 1, 1>}, {transform_indices = @transform_6, window_bounds = array<i64: 1, 1, 128>}]} {
    %c0 = arith.constant 0 : index
    %c0_0 = arith.constant 0 : index
    %c0_1 = arith.constant 0 : index
    %0 = vector.load %arg2[%c0, %c0_0, %c0_1] : memref<1x3x128xf32, #tpu.memory_space<vmem>>, vector<1x3x128xf32>
    %1 = vector.shape_cast %0 : vector<1x3x128xf32> to vector<3x128xf32>
    %c0_2 = arith.constant 0 : index
    %c0_3 = arith.constant 0 : index
    %c0_4 = arith.constant 0 : index
    %2 = vector.load %arg3[%c0_2, %c0_3, %c0_4] : memref<1x96x1xf32, #tpu.memory_space<vmem>>, vector<1x96x1xf32>
    %3 = vector.shape_cast %2 : vector<1x96x1xf32> to vector<96x1xf32>
    %c0_5 = arith.constant 0 : index
    %c0_6 = arith.constant 0 : index
    %4 = vector.load %arg4[%c0_5, %c0_6] : memref<96x3xf32, #tpu.memory_space<vmem>>, vector<96x3xf32>
    %cst = arith.constant dense<0.000000e+00> : vector<96x128xf32>
    %5 = tpu.matmul %4, %1, %cst {dimension_numbers = #tpu.dot_dimension_numbers<[1], [0], [0], [1], [0, 0, 1, 1], [], []>} : vector<96x3xf32>, vector<3x128xf32>, vector<96x128xf32> -> vector<96x128xf32>
    %6 = math.sin %5 : vector<96x128xf32>
    %7 = vector.extract_strided_slice %6 {offsets = [0, 0], sizes = [32, 128], strides = [1, 1]} : vector<96x128xf32> to vector<32x128xf32>
    %8 = vector.extract_strided_slice %3 {offsets = [0, 0], sizes = [32, 1], strides = [1, 1]} : vector<96x1xf32> to vector<32x1xf32>
    %9 = vector.broadcast %8 : vector<32x1xf32> to vector<32x128xf32>
    %10 = arith.mulf %7, %9 : vector<32x128xf32>
    %c0_7 = arith.constant 0 : index
    %c0_8 = arith.constant 0 : index
    %11 = vector.load %arg5[%c0_7, %c0_8] : memref<64x32xf32, #tpu.memory_space<vmem>>, vector<64x32xf32>
    %12 = vector.extract_strided_slice %11 {offsets = [0, 0], sizes = [32, 32], strides = [1, 1]} : vector<64x32xf32> to vector<32x32xf32>
    %13 = vector.extract_strided_slice %3 {offsets = [32, 0], sizes = [32, 1], strides = [1, 1]} : vector<96x1xf32> to vector<32x1xf32>
    %cst_9 = arith.constant dense<0.000000e+00> : vector<32x128xf32>
    %14 = tpu.matmul %12, %10, %cst_9 {dimension_numbers = #tpu.dot_dimension_numbers<[1], [0], [0], [1], [0, 0, 1, 1], [], []>} : vector<32x32xf32>, vector<32x128xf32>, vector<32x128xf32> -> vector<32x128xf32>
    %15 = vector.broadcast %13 : vector<32x1xf32> to vector<32x128xf32>
    %16 = arith.addf %14, %15 : vector<32x128xf32>
    %17 = vector.extract_strided_slice %6 {offsets = [32, 0], sizes = [32, 128], strides = [1, 1]} : vector<96x128xf32> to vector<32x128xf32>
    %18 = arith.mulf %17, %16 : vector<32x128xf32>
    %19 = vector.extract_strided_slice %11 {offsets = [32, 0], sizes = [32, 32], strides = [1, 1]} : vector<64x32xf32> to vector<32x32xf32>
    %20 = vector.extract_strided_slice %3 {offsets = [64, 0], sizes = [32, 1], strides = [1, 1]} : vector<96x1xf32> to vector<32x1xf32>
    %cst_10 = arith.constant dense<0.000000e+00> : vector<32x128xf32>
    %21 = tpu.matmul %19, %18, %cst_10 {dimension_numbers = #tpu.dot_dimension_numbers<[1], [0], [0], [1], [0, 0, 1, 1], [], []>} : vector<32x32xf32>, vector<32x128xf32>, vector<32x128xf32> -> vector<32x128xf32>
    %22 = vector.broadcast %20 : vector<32x1xf32> to vector<32x128xf32>
    %23 = arith.addf %21, %22 : vector<32x128xf32>
    %24 = vector.extract_strided_slice %6 {offsets = [64, 0], sizes = [32, 128], strides = [1, 1]} : vector<96x128xf32> to vector<32x128xf32>
    %25 = arith.mulf %24, %23 : vector<32x128xf32>
    %c0_11 = arith.constant 0 : index
    %c0_12 = arith.constant 0 : index
    %26 = vector.load %arg6[%c0_11, %c0_12] : memref<1x32xf32, #tpu.memory_space<vmem>>, vector<1x32xf32>
    %cst_13 = arith.constant dense<0.000000e+00> : vector<1x128xf32>
    %27 = tpu.matmul %26, %25, %cst_13 {dimension_numbers = #tpu.dot_dimension_numbers<[1], [0], [0], [1], [0, 0, 1, 1], [], []>} : vector<1x32xf32>, vector<32x128xf32>, vector<1x128xf32> -> vector<1x128xf32>
    %c0_14 = arith.constant 0 : index
    %c0_15 = arith.constant 0 : index
    %28 = vector.load %arg7[%c0_14, %c0_15] : memref<1x1xf32, #tpu.memory_space<vmem>>, vector<1x1xf32>
    %29 = vector.broadcast %28 : vector<1x1xf32> to vector<1x128xf32>
    %30 = arith.addf %27, %29 : vector<1x128xf32>
    %c0_16 = arith.constant 0 : index
    %c0_17 = arith.constant 0 : index
    %c0_18 = arith.constant 0 : index
    %31 = vector.load %arg8[%c0_16, %c0_17, %c0_18] : memref<1x1x128xf32, #tpu.memory_space<vmem>>, vector<1x1x128xf32>
    %32 = vector.shape_cast %31 : vector<1x1x128xf32> to vector<1x128xf32>
    %33 = vector.shape_cast %30 : vector<1x128xf32> to vector<1x1x128xf32>
    tpu.vector_store %arg8[%c0_16, %c0_17, %c0_18], %33 {strides = array<i32>} : memref<1x1x128xf32, #tpu.memory_space<vmem>>, vector<1x1x128xf32>,
    return
  }
  func.func @transform_0(%arg0: i32, %arg1: i32) -> (i32, i32, i32) {
    %c0_i32 = arith.constant 0 : i32
    %c0_i32_0 = arith.constant 0 : i32
    return %arg0, %c0_i32, %arg1 : i32, i32, i32
  }
  func.func @transform_1(%arg0: i32, %arg1: i32) -> (i32, i32, i32) {
    %c0_i32 = arith.constant 0 : i32
    %c0_i32_0 = arith.constant 0 : i32
    %c0_i32_1 = arith.constant 0 : i32
    return %arg0, %c0_i32, %c0_i32_0 : i32, i32, i32
  }
  func.func @transform_2(%arg0: i32, %arg1: i32) -> (i32, i32) {
    %c0_i32 = arith.constant 0 : i32
    %c0_i32_0 = arith.constant 0 : i32
    %c0_i32_1 = arith.constant 0 : i32
    return %c0_i32, %c0_i32_0 : i32, i32
  }
  func.func @transform_3(%arg0: i32, %arg1: i32) -> (i32, i32) {
    %c0_i32 = arith.constant 0 : i32
    %c0_i32_0 = arith.constant 0 : i32
    %c0_i32_1 = arith.constant 0 : i32
    return %c0_i32, %c0_i32_0 : i32, i32
  }
  func.func @transform_4(%arg0: i32, %arg1: i32) -> (i32, i32) {
    %c0_i32 = arith.constant 0 : i32
    %c0_i32_0 = arith.constant 0 : i32
    %c0_i32_1 = arith.constant 0 : i32
    return %c0_i32, %c0_i32_0 : i32, i32
  }
  func.func @transform_5(%arg0: i32, %arg1: i32) -> (i32, i32) {
    %c0_i32 = arith.constant 0 : i32
    %c0_i32_0 = arith.constant 0 : i32
    %c0_i32_1 = arith.constant 0 : i32
    return %c0_i32, %c0_i32_0 : i32, i32
  }
  func.func @transform_6(%arg0: i32, %arg1: i32) -> (i32, i32, i32) {
    %c0_i32 = arith.constant 0 : i32
    %c0_i32_0 = arith.constant 0 : i32
    return %arg0, %c0_i32, %arg1 : i32, i32, i32
  }
}

</mosaic_0001>

<llo_original>
// kernel: tpu_custom_call.1
$region0: #{tpu_custom_call.1}
  #allocation0 [shape = 'u32[]', space=smem, size = 0x4, offset = 0x4, fixed_abs, tag = 'smem constant byte address 0x4 - core index']
  #allocation1 [shape = 'u32[144,128]{1,0:T(1,128)}', space=vmem, size = 0x12000, scoped, tag = 'internal scratch']
  #allocation2 [shape = 'f32[1,1]{1,0:T(1,128)S(1)}', space=vmem, size = 0x200, scoped, tag = 'scoped memory for tpu_custom_call.1']
  %s0 = inlined_call_operand.vmem [shape: f32[2,3,128], index: 0, kind: input, shape index: {}]
  %s1 = inlined_call_operand.vmem [shape: f32[2,96,1], index: 1, kind: input, shape index: {}]
  %s2 = inlined_call_operand.vmem [shape: f32[96,3], index: 2, kind: input, shape index: {}]
  %s3 = inlined_call_operand.vmem [shape: f32[64,32], index: 3, kind: input, shape index: {}]
  %s4 = inlined_call_operand.vmem [shape: f32[1,32], index: 4, kind: input, shape index: {}]
  %s5 = inlined_call_operand.<no memory space> [shape: f32[1,1], index: 5, kind: input, shape index: {}]
  %s6 = inlined_call_operand.hbm [shape: f32[2,1,128], index: 6, kind: output, shape index: {}]
  %s7 = sld [smem:[#allocation0]]
  $region57: #{tpu_custom_call.1} parent=0
    _
  %s9 = ssub.s32 1, %s7
  %s10 = scalar_select 0, %s9, %s7
  %v11 = vstv %s5
  %12 = vst [vmem:[#allocation2] sm:$0x1] %v11
  $region1: #{tpu_custom_call.1} parent=0
    #allocation3 [shape = 'u8[1024]{0}', space=vmem, size = 0x400, scoped, tag = 'output window, operand 0']
    #allocation4 [shape = 's32[2]{0}', space=sflag, size = 0x8, scoped, tag = 'scoped memory for tpu_custom_call.1']
    %13 = vsyncpa [#allocation4], 0
    %s14 = scalar_lea.sflag [#allocation4], 1
    %15 = vsyncpa %s14, 0
    loop: start=0, step=1, limit=4
    $region2: #{tpu_custom_call.1} parent=1 // loop_pre_header
      _
    $region3: #{tpu_custom_call.1} parent=1 // loop_header
      %s17 = sphi 0, %s21
      %p18 = scmp.ge.s32.totalorder %s17, 4
      %s24 = sphi 0, %s36
      %s25 = sphi 0, %s32
      %s26 = sphi 0, %s24
      %s27 = sphi 0, %s25
      %s28 = sphi 0, %s26
      %s29 = sphi 0, %s27
      %s41 = sphi 0, %s43
      %s44 = sphi 0, %s41
      %s45 = sphi 0, %s44
      %s61 = sphi 0, %s45
      %s67 = sphi 0, %s69
      %s70 = sphi 0, %s67
      %s71 = sphi 0, %s70
      %s87 = sphi 0, %s71
      %s91 = sphi 0, %s91
      %s93 = sphi 0, %s91
      %s94 = sphi 0, %s93
      %s108 = sphi 0, %s94
      %s112 = sphi 0, %s112
      %s114 = sphi 0, %s112
      %s115 = sphi 0, %s114
      %s129 = sphi 0, %s115
      %s133 = sphi 0, %s133
      %s135 = sphi 0, %s133
      %s136 = sphi 0, %s135
      %s150 = sphi 0, %s136
      %s154 = sphi 0, %s154
      %s156 = sphi 0, %s154
      %s157 = sphi 0, %s156
      %s171 = sphi 0, %s157
      %s179 = sphi 0, %s181
      %s182 = sphi 0, %s179
      %s183 = sphi 0, %s182
      %s199 = sphi 0, %s183
    $region4: #{tpu_custom_call.1} parent=1 // loop_header_branch
      %20 = sbr.rel (%p18) target = $region8
    $region5: #{tpu_custom_call.1} parent=1 // loop_body
      %s22 = ssub.s32 %s17, 1
      %s23 = ssub.s32 %s17, 2
      %s30 = sadd.s32 1, %s25
      %p31 = scmp.ge.s32.totalorder %s30, 1
      %s32 = scalar_select %p31, 0, %s30
      %s33 = sadd.s32 1, %s24
      %s34 = scalar_select %p31, %s33, %s24
      %p35 = scmp.ge.s32.totalorder %s34, 2
      %s36 = scalar_select %p35, 0, %s34
      %s37 = ssub.s32 %s24, %s36
      %s38 = ssub.s32 %s25, %s32
      %s39 = sor.u32 %s37, %s38
      %p40 = scmp.eq.s32.totalorder %s39, 0
      %s42 = sadd.s32 %s41, 1
      %s43 = scalar_select %p40, %s41, %s42
      %p46 = pneg %p40
      %p47 = scmp.eq.s32.totalorder %s17, 1
      %p48 = por %p46, %p47
      %p49 = scmp.ne.s32.totalorder %s41, %s44
      %p50 = scmp.eq.s32.totalorder %s17, 0
      %p51 = por %p49, %p50
      %p52 = scmp.ne.s32.totalorder %s41, %s44
      %p53 = scmp.eq.s32.totalorder %s22, 1
      %p54 = por %p52, %p53
      %p55 = scmp.ne.s32.totalorder %s44, %s45
      %p56 = scmp.eq.s32.totalorder %s22, 0
      %p57 = por %p55, %p56
      %p58 = scmp.ne.s32.totalorder %s44, %s45
      %p59 = scmp.eq.s32.totalorder %s23, 1
      %p60 = por %p58, %p59
      %p62 = scmp.ne.s32.totalorder %s45, %s61
      %p63 = scmp.eq.s32.totalorder %s23, 0
      %p64 = por %p62, %p63
      %s65 = ssub.s32 %s24, %s36
      %p66 = scmp.eq.s32.totalorder %s65, 0
      %s68 = sadd.s32 %s67, 1
      %s69 = scalar_select %p66, %s67, %s68
      %p72 = pneg %p66
      %p73 = scmp.eq.s32.totalorder %s17, 1
      %p74 = por %p72, %p73
      %p75 = scmp.ne.s32.totalorder %s67, %s70
      %p76 = scmp.eq.s32.totalorder %s17, 0
      %p77 = por %p75, %p76
      %p78 = scmp.ne.s32.totalorder %s67, %s70
      %p79 = scmp.eq.s32.totalorder %s22, 1
      %p80 = por %p78, %p79
      %p81 = scmp.ne.s32.totalorder %s70, %s71
      %p82 = scmp.eq.s32.totalorder %s22, 0
      %p83 = por %p81, %p82
      %p84 = scmp.ne.s32.totalorder %s70, %s71
      %p85 = scmp.eq.s32.totalorder %s23, 1
      %p86 = por %p84, %p85
      %p88 = scmp.ne.s32.totalorder %s71, %s87
      %p89 = scmp.eq.s32.totalorder %s23, 0
      %p90 = por %p88, %p89
      %s92 = sadd.s32 %s91, 1
      %p95 = scmp.eq.s32.totalorder %s17, 1
      %p96 = scmp.ne.s32.totalorder %s91, %s93
      %p97 = scmp.eq.s32.totalorder %s17, 0
      %p98 = por %p96, %p97
      %p99 = scmp.ne.s32.totalorder %s91, %s93
      %p100 = scmp.eq.s32.totalorder %s22, 1
      %p101 = por %p99, %p100
      %p102 = scmp.ne.s32.totalorder %s93, %s94
      %p103 = scmp.eq.s32.totalorder %s22, 0
      %p104 = por %p102, %p103
      %p105 = scmp.ne.s32.totalorder %s93, %s94
      %p106 = scmp.eq.s32.totalorder %s23, 1
      %p107 = por %p105, %p106
      %p109 = scmp.ne.s32.totalorder %s94, %s108
      %p110 = scmp.eq.s32.totalorder %s23, 0
      %p111 = por %p109, %p110
      %s113 = sadd.s32 %s112, 1
      %p116 = scmp.eq.s32.totalorder %s17, 1
      %p117 = scmp.ne.s32.totalorder %s112, %s114
      %p118 = scmp.eq.s32.totalorder %s17, 0
      %p119 = por %p117, %p118
      %p120 = scmp.ne.s32.totalorder %s112, %s114
      %p121 = scmp.eq.s32.totalorder %s22, 1
      %p122 = por %p120, %p121
      %p123 = scmp.ne.s32.totalorder %s114, %s115
      %p124 = scmp.eq.s32.totalorder %s22, 0
      %p125 = por %p123, %p124
      %p126 = scmp.ne.s32.totalorder %s114, %s115
      %p127 = scmp.eq.s32.totalorder %s23, 1
      %p128 = por %p126, %p127
      %p130 = scmp.ne.s32.totalorder %s115, %s129
      %p131 = scmp.eq.s32.totalorder %s23, 0
      %p132 = por %p130, %p131
      %s134 = sadd.s32 %s133, 1
      %p137 = scmp.eq.s32.totalorder %s17, 1
      %p138 = scmp.ne.s32.totalorder %s133, %s135
      %p139 = scmp.eq.s32.totalorder %s17, 0
      %p140 = por %p138, %p139
      %p141 = scmp.ne.s32.totalorder %s133, %s135
      %p142 = scmp.eq.s32.totalorder %s22, 1
      %p143 = por %p141, %p142
      %p144 = scmp.ne.s32.totalorder %s135, %s136
      %p145 = scmp.eq.s32.totalorder %s22, 0
      %p146 = por %p144, %p145
      %p147 = scmp.ne.s32.totalorder %s135, %s136
      %p148 = scmp.eq.s32.totalorder %s23, 1
      %p149 = por %p147, %p148
      %p151 = scmp.ne.s32.totalorder %s136, %s150
      %p152 = scmp.eq.s32.totalorder %s23, 0
      %p153 = por %p151, %p152
      %s155 = sadd.s32 %s154, 1
      %p158 = scmp.eq.s32.totalorder %s17, 1
      %p159 = scmp.ne.s32.totalorder %s154, %s156
      %p160 = scmp.eq.s32.totalorder %s17, 0
      %p161 = por %p159, %p160
      %p162 = scmp.ne.s32.totalorder %s154, %s156
      %p163 = scmp.eq.s32.totalorder %s22, 1
      %p164 = por %p162, %p163
      %p165 = scmp.ne.s32.totalorder %s156, %s157
      %p166 = scmp.eq.s32.totalorder %s22, 0
      %p167 = por %p165, %p166
      %p168 = scmp.ne.s32.totalorder %s156, %s157
      %p169 = scmp.eq.s32.totalorder %s23, 1
      %p170 = por %p168, %p169
      %p172 = scmp.ne.s32.totalorder %s157, %s171
      %p173 = scmp.eq.s32.totalorder %s23, 0
      %p174 = por %p172, %p173
      %s175 = ssub.s32 %s24, %s36
      %s176 = ssub.s32 %s25, %s32
      %s177 = sor.u32 %s175, %s176
      %p178 = scmp.eq.s32.totalorder %s177, 0
      %s180 = sadd.s32 %s179, 1
      %s181 = scalar_select %p178, %s179, %s180
      %p184 = pneg %p178
      %p185 = scmp.eq.s32.totalorder %s17, 1
      %p186 = por %p184, %p185
      %p187 = scmp.ne.s32.totalorder %s179, %s182
      %p188 = scmp.eq.s32.totalorder %s17, 0
      %p189 = por %p187, %p188
      %p190 = scmp.ne.s32.totalorder %s179, %s182
      %p191 = scmp.eq.s32.totalorder %s22, 1
      %p192 = por %p190, %p191
      %p193 = scmp.ne.s32.totalorder %s182, %s183
      %p194 = scmp.eq.s32.totalorder %s22, 0
      %p195 = por %p193, %p194
      %p196 = scmp.ne.s32.totalorder %s182, %s183
      %p197 = scmp.eq.s32.totalorder %s23, 1
      %p198 = por %p196, %p197
      %p200 = scmp.ne.s32.totalorder %s183, %s199
      %p201 = scmp.eq.s32.totalorder %s23, 0
      %p202 = por %p200, %p201
      %p203 = scmp.le.s32.totalorder 1, %s17
      %p204 = scmp.lt.s32.totalorder %s17, 3
      %p205 = pnand %p203, %p204
      %p206 = pneg %p205
      // Predicated region
      $region9: #{tpu_custom_call.1} parent=5 // pred_check
        _
      $region10: #{tpu_custom_call.1} parent=5 // pred_check_branch
        %208 = sbr.rel (%p205) target = $region12
      $region11: #{tpu_custom_call.1} parent=5 // pred_region
        %s209 = ssub.s32 %s17, 1
        // Predicated region
        $region13: #{tpu_custom_call.1} parent=11 // pred_check
          %p210 = pneg %p104
        $region14: #{tpu_custom_call.1} parent=11 // pred_check_branch
          %212 = sbr.rel (%p210) target = $region16
        $region15: #{tpu_custom_call.1} parent=11 // pred_region
          _
        $region16: #{tpu_custom_call.1} parent=11 // pred_fallthru
          _
        // Predicated region
        $region17: #{tpu_custom_call.1} parent=11 // pred_check
          %p213 = pneg %p125
        $region18: #{tpu_custom_call.1} parent=11 // pred_check_branch
          %215 = sbr.rel (%p213) target = $region20
        $region19: #{tpu_custom_call.1} parent=11 // pred_region
          _
        $region20: #{tpu_custom_call.1} parent=11 // pred_fallthru
          _
        // Predicated region
        $region21: #{tpu_custom_call.1} parent=11 // pred_check
          %p216 = pneg %p146
        $region22: #{tpu_custom_call.1} parent=11 // pred_check_branch
          %218 = sbr.rel (%p216) target = $region24
        $region23: #{tpu_custom_call.1} parent=11 // pred_region
          _
        $region24: #{tpu_custom_call.1} parent=11 // pred_fallthru
          _
        // Predicated region
        $region25: #{tpu_custom_call.1} parent=11 // pred_check
          %p219 = pneg %p167
        $region26: #{tpu_custom_call.1} parent=11 // pred_check_branch
          %221 = sbr.rel (%p219) target = $region28
        $region27: #{tpu_custom_call.1} parent=11 // pred_region
          _
        $region28: #{tpu_custom_call.1} parent=11 // pred_fallthru
          _
      $region12: #{tpu_custom_call.1} parent=5 // pred_fallthru
        _
      %p222 = scmp.lt.s32.totalorder %s17, 2
      // Predicated region
      $region29: #{tpu_custom_call.1} parent=5 // pred_check
        %p223 = pneg %p222
      $region30: #{tpu_custom_call.1} parent=5 // pred_check_branch
        %225 = sbr.rel (%p223) target = $region32
      $region31: #{tpu_custom_call.1} parent=5 // pred_region
        // Predicated region
        $region33: #{tpu_custom_call.1} parent=31 // pred_check
          %p226 = pneg %p51
        $region34: #{tpu_custom_call.1} parent=31 // pred_check_branch
          %228 = sbr.rel (%p226) target = $region36
        $region35: #{tpu_custom_call.1} parent=31 // pred_region
          %p229 = scmp.lt.s32.totalorder %s24, 1
          %s230 = scalar_select %p229, %s24, 1
          %p231 = scmp.lt.s32.totalorder %s25, 0
          %s232 = scalar_select %p231, %s25, 0
          %s233 = sadd.s32 %s232, %s230
          %s234 = smul.addr %s233, 4
          %s235 = scalar_lea.vmem %s0, %s234
        $region36: #{tpu_custom_call.1} parent=31 // pred_fallthru
          _
        // Predicated region
        $region37: #{tpu_custom_call.1} parent=31 // pred_check
          %p236 = pneg %p77
        $region38: #{tpu_custom_call.1} parent=31 // pred_check_branch
          %238 = sbr.rel (%p236) target = $region40
        $region39: #{tpu_custom_call.1} parent=31 // pred_region
          %p239 = scmp.lt.s32.totalorder %s24, 1
          %s240 = scalar_select %p239, %s24, 1
          %s241 = smul.addr %s240, 12
          %s242 = smul.addr %s241, 8
          %s243 = scalar_lea.vmem %s1, %s242
        $region40: #{tpu_custom_call.1} parent=31 // pred_fallthru
          _
      $region32: #{tpu_custom_call.1} parent=5 // pred_fallthru
        _
      %p244 = scmp.le.s32.totalorder 1, %s17
      %p245 = scmp.lt.s32.totalorder %s17, 3
      %p246 = pnand %p244, %p245
      %p247 = pneg %p246
      // Predicated region
      $region41: #{tpu_custom_call.1} parent=5 // pred_check
        _
      $region42: #{tpu_custom_call.1} parent=5 // pred_check_branch
        %249 = sbr.rel (%p246) target = $region44
      $region43: #{tpu_custom_call.1} parent=5 // pred_region
        %s250 = ssub.s32 %s17, 1
        %p251 = scmp.lt.s32.totalorder %s26, 1
        %s252 = scalar_select %p251, %s26, 1
        %p253 = scmp.lt.s32.totalorder %s27, 0
        %s254 = scalar_select %p253, %s27, 0
        %s255 = sadd.s32 %s254, %s252
        %s256 = smul.addr %s255, 4
        %s257 = scalar_lea.vmem %s0, %s256
        %p258 = pneg %p57
        %p259 = pneg %p54
        %p260 = scmp.lt.s32.totalorder %s26, 1
        %s261 = scalar_select %p260, %s26, 1
        %s262 = smul.addr %s261, 12
        %s263 = smul.addr %s262, 8
        %s264 = scalar_lea.vmem %s1, %s263
        %p265 = pneg %p83
        %p266 = pneg %p80
        %p267 = pneg %p104
        %p268 = pneg %p101
        %p269 = pneg %p125
        %p270 = pneg %p122
        %p271 = pneg %p146
        %p272 = pneg %p143
        %p273 = pneg %p167
        %p274 = pneg %p164
        %p275 = pneg %p195
        %p276 = pneg %p192
        %s277 = sand.u32 %s182, 1
        %s278 = scalar_lea.sflag [#allocation4], %s277
        %s279 = sand.u32 %s182, 1
        %s280 = scalar_lea.vmem [#allocation3], %s279
        %p281 = scmp.lt.s32.totalorder %s26, 1
        %s282 = scalar_select %p281, %s26, 1
        %p283 = scmp.lt.s32.totalorder %s27, 0
        %s284 = scalar_select %p283, %s27, 0
        %s285 = sadd.s32 %s284, %s282
        %s286 = smul.addr %s285, 4
        %s287 = scalar_lea.vmem %s0, %s286
        %p288 = scmp.lt.s32.totalorder %s26, 1
        %s289 = scalar_select %p288, %s26, 1
        %s290 = smul.addr %s289, 12
        %s291 = smul.addr %s290, 8
        %s292 = scalar_lea.vmem %s1, %s291
        %v293 = vld [vmem:[%s287] sm:$0x7]
        %v294 = vld [vmem:[%s292] sm:$0xff]
        %v295 = vld [vmem:[%s292 + $0x8] sm:$0xff]
        %v296 = vld [vmem:[%s292 + $0x10] sm:$0xff]
        %v297 = vld [vmem:[%s292 + $0x18] sm:$0xff]
        %v298 = vld [vmem:[%s292 + $0x20] sm:$0xff]
        %v299 = vld [vmem:[%s292 + $0x28] sm:$0xff]
        %v300 = vld [vmem:[%s292 + $0x30] sm:$0xff]
        %v301 = vld [vmem:[%s292 + $0x38] sm:$0xff]
        %v302 = vld [vmem:[%s292 + $0x40] sm:$0xff]
        %v303 = vld [vmem:[%s292 + $0x48] sm:$0xff]
        %v304 = vld [vmem:[%s292 + $0x50] sm:$0xff]
        %v305 = vld [vmem:[%s292 + $0x58] sm:$0xff]
        %v306 = vld [vmem:[%s2] sm:$0xff]
        %v307 = vld [vmem:[%s2 + $0x8] sm:$0xff]
        %v308 = vld [vmem:[%s2 + $0x10] sm:$0xff]
        %v309 = vld [vmem:[%s2 + $0x18] sm:$0xff]
        %v310 = vld [vmem:[%s2 + $0x20] sm:$0xff]
        %v311 = vld [vmem:[%s2 + $0x28] sm:$0xff]
        %v312 = vld [vmem:[%s2 + $0x30] sm:$0xff]
        %v313 = vld [vmem:[%s2 + $0x38] sm:$0xff]
        %v314 = vld [vmem:[%s2 + $0x40] sm:$0xff]
        %v315 = vld [vmem:[%s2 + $0x48] sm:$0xff]
        %v316 = vld [vmem:[%s2 + $0x50] sm:$0xff]
        %v317 = vld [vmem:[%s2 + $0x58] sm:$0xff]
        %vm318 = vcmask 23552
        %v320 = vsel %vm318, %v306, 0
        %v323 = vsel %vm318, %v307, 0
        %v326 = vsel %vm318, %v308, 0
        %v329 = vsel %vm318, %v309, 0
        %v332 = vsel %vm318, %v310, 0
        %v335 = vsel %vm318, %v311, 0
        %v338 = vsel %vm318, %v312, 0
        %v341 = vsel %vm318, %v313, 0
        %v344 = vsel %vm318, %v314, 0
        %v347 = vsel %vm318, %v315, 0
        %v350 = vsel %vm318, %v316, 0
        %v353 = vsel %vm318, %v317, 0
        %vm355 = vcmask 1042432
        %v357 = vsel %vm355, %v293, 0
        %359 = vmatprep.subr.mxu0 0.0
        %360 = vmatpush1.msra.mxu0 %v357
        %361 = vmatprep.subr.mxu0 0.0
        %362 = vmatpush1.msra.mxu0 0.0
        %363 = vmatprep.subr.mxu0 0.0
        %364 = vmatpush1.msra.mxu0 0.0
        %365 = vmatprep.subr.mxu0 0.0
        %366 = vmatpush1.msra.mxu0 0.0
        %367 = vmatprep.subr.mxu0 0.0
        %368 = vmatpush1.msra.mxu0 0.0
        %369 = vmatprep.subr.mxu0 0.0
        %370 = vmatpush1.msra.mxu0 0.0
        %371 = vmatprep.subr.mxu0 0.0
        %372 = vmatpush1.msra.mxu0 0.0
        %373 = vmatprep.subr.mxu0 0.0
        %374 = vmatpush1.msra.mxu0 0.0
        %375 = vmatprep.subr.mxu0 0.0
        %376 = vmatpush1.msra.mxu0 0.0
        %377 = vmatprep.subr.mxu0 0.0
        %378 = vmatpush1.msra.mxu0 0.0
        %379 = vmatprep.subr.mxu0 0.0
        %380 = vmatpush1.msra.mxu0 0.0
        %381 = vmatprep.subr.mxu0 0.0
        %382 = vmatpush1.msra.mxu0 0.0
        %383 = vmatprep.subr.mxu0 0.0
        %384 = vmatpush1.msra.mxu0 0.0
        %385 = vmatprep.subr.mxu0 0.0
        %386 = vmatpush1.msra.mxu0 0.0
        %387 = vmatprep.subr.mxu0 0.0
        %388 = vmatpush1.msra.mxu0 0.0
        %389 = vmatprep.subr.mxu0 0.0
        %390 = vmatpush1.msra.mxu0 0.0
        %391 = vmatprep.subr.mxu0 0.0
        %392 = vmatpush1.msra.mxu0 0.0
        %393 = vmatprep.subr.mxu0 0.0
        %394 = vmatpush1.msra.mxu0 0.0
        %395 = vmatprep.subr.mxu0 0.0
        %396 = vmatpush1.msra.mxu0 0.0
        %397 = vmatprep.subr.mxu0 0.0
        %398 = vmatpush1.msra.mxu0 0.0
        %399 = vmatprep.subr.mxu0 0.0
        %400 = vmatpush1.msra.mxu0 0.0
        %401 = vmatprep.subr.mxu0 0.0
        %402 = vmatpush1.msra.mxu0 0.0
        %403 = vmatprep.subr.mxu0 0.0
        %404 = vmatpush1.msra.mxu0 0.0
        %405 = vmatprep.subr.mxu0 0.0
        %406 = vmatpush1.msra.mxu0 0.0
        %407 = vmatprep.subr.mxu0 0.0
        %408 = vmatpush1.msra.mxu0 0.0
        %409 = vmatprep.subr.mxu0 0.0
        %410 = vmatpush1.msra.mxu0 0.0
        %411 = vmatprep.subr.mxu0 0.0
        %412 = vmatpush1.msra.mxu0 0.0
        %413 = vmatprep.subr.mxu0 0.0
        %414 = vmatpush1.msra.mxu0 0.0
        %415 = vmatprep.subr.mxu0 0.0
        %416 = vmatpush1.msra.mxu0 0.0
        %417 = vmatprep.subr.mxu0 0.0
        %418 = vmatpush1.msra.mxu0 0.0
        %419 = vmatprep.subr.mxu0 0.0
        %420 = vmatpush1.msra.mxu0 0.0
        %421 = vmatprep.subr.mxu0 0.0
        %422 = vmatpush1.msra.mxu0 0.0
        %423 = vmatprep.mubr.f32.mxu0 0.0
        %424 = vmatmul.mubr.f32.gmra.mrb[0].mxu0 %v320
        %v425 = vpop.f32.mrb[0].mxu0
        %v426 = vadd.f32 0.0, %v425
        %v427 = vpop.f32.mrb[0].mxu0
        %428 = vmatprep.mubr.f32.mxu0 0.0
        %429 = vmatmul.mubr.f32.gmra.mrb[0].mxu0 %v323
        %v430 = vpop.f32.mrb[0].mxu0
        %v431 = vadd.f32 0.0, %v430
        %v432 = vpop.f32.mrb[0].mxu0
        %433 = vmatprep.mubr.f32.mxu0 0.0
        %434 = vmatmul.mubr.f32.gmra.mrb[0].mxu0 %v326
        %v435 = vpop.f32.mrb[0].mxu0
        %v436 = vadd.f32 0.0, %v435
        %v437 = vpop.f32.mrb[0].mxu0
        %438 = vmatprep.mubr.f32.mxu0 0.0
        %439 = vmatmul.mubr.f32.gmra.mrb[0].mxu0 %v329
        %v440 = vpop.f32.mrb[0].mxu0
        %v441 = vadd.f32 0.0, %v440
        %v442 = vpop.f32.mrb[0].mxu0
        %443 = vmatprep.mubr.f32.mxu0 0.0
        %444 = vmatmul.mubr.f32.gmra.mrb[0].mxu0 %v332
        %v445 = vpop.f32.mrb[0].mxu0
        %v446 = vadd.f32 0.0, %v445
        %v447 = vpop.f32.mrb[0].mxu0
        %448 = vmatprep.mubr.f32.mxu0 0.0
        %449 = vmatmul.mubr.f32.gmra.mrb[0].mxu0 %v335
        %v450 = vpop.f32.mrb[0].mxu0
        %v451 = vadd.f32 0.0, %v450
        %v452 = vpop.f32.mrb[0].mxu0
        %453 = vmatprep.mubr.f32.mxu0 0.0
        %454 = vmatmul.mubr.f32.gmra.mrb[0].mxu0 %v338
        %v455 = vpop.f32.mrb[0].mxu0
        %v456 = vadd.f32 0.0, %v455
        %v457 = vpop.f32.mrb[0].mxu0
        %458 = vmatprep.mubr.f32.mxu0 0.0
        %459 = vmatmul.mubr.f32.gmra.mrb[0].mxu0 %v341
        %v460 = vpop.f32.mrb[0].mxu0
        %v461 = vadd.f32 0.0, %v460
        %v462 = vpop.f32.mrb[0].mxu0
        %463 = vmatprep.mubr.f32.mxu0 0.0
        %464 = vmatmul.mubr.f32.gmra.mrb[0].mxu0 %v344
        %v465 = vpop.f32.mrb[0].mxu0
        %v466 = vadd.f32 0.0, %v465
        %v467 = vpop.f32.mrb[0].mxu0
        %468 = vmatprep.mubr.f32.mxu0 0.0
        %469 = vmatmul.mubr.f32.gmra.mrb[0].mxu0 %v347
        %v470 = vpop.f32.mrb[0].mxu0
        %v471 = vadd.f32 0.0, %v470
        %v472 = vpop.f32.mrb[0].mxu0
        %473 = vmatprep.mubr.f32.mxu0 0.0
        %474 = vmatmul.mubr.f32.gmra.mrb[0].mxu0 %v350
        %v475 = vpop.f32.mrb[0].mxu0
        %v476 = vadd.f32 0.0, %v475
        %v477 = vpop.f32.mrb[0].mxu0
        %478 = vmatprep.mubr.f32.mxu0 0.0
        %479 = vmatmul.mubr.f32.gmra.mrb[0].mxu0 %v353
        %v480 = vpop.f32.mrb[0].mxu0
        %v481 = vadd.f32 0.0, %v480
        %v482 = vpop.f32.mrb[0].mxu0
        %483 = vdwg.mxu0
        %v484 = vand.u32 2147483647, %v426
        %vm485 = vcmp.le.f32.partialorder %v484, 0.7853982
        %vm486 = vcmp.lt.s32.totalorder %v426, 0
        %v487 = vand.u32 %v426, 2139095040
        %v488 = vshrl.u32 %v487, 23
        %v489 = vsub.s32 %v488, 127
        %v490 = vand.u32 2147483647, %v426
        %v491 = vand.u32 %v490, 8388607
        %v492 = vor.u32 %v491, 8388608
        %v493 = vsub.s32 0, %v492
        %v494 = vadd.s32 %v489, 1
        %vm495 = vcmp.gt.s32.totalorder %v494, 0
        %v496 = vsel %vm495, %v494, 0
        %v497 = vshrl.u32 %v496, 5
        %v498 = vand.u32 %v496, 31
        %v499 = vsub.s32 32, %v498
        %v500 = vshrl.u32 683565275, %v499
        %v501 = vshll.u32 683565275, %v498
        %v502 = vshrl.u32 2475754826, %v499
        %v503 = vor.u32 %v501, %v502
        %v504 = vshll.u32 2475754826, %v498
        %v505 = vshrl.u32 2131351028, %v499
        %v506 = vor.u32 %v504, %v505
        %v507 = vshll.u32 2131351028, %v498
        %v508 = vshrl.u32 2102212464, %v499
        %v509 = vor.u32 %v507, %v508
        %v510 = vshll.u32 2102212464, %v498
        %v511 = vshrl.u32 920167782, %v499
        %v512 = vor.u32 %v510, %v511
        %v513 = vshll.u32 920167782, %v498
        %v514 = vshrl.u32 1326507024, %v499
        %v515 = vor.u32 %v513, %v514
        %vm516 = vcmp.lt.s32.totalorder %v497, 1
        %vm517 = vcmp.lt.s32.totalorder %v497, 2
        %vm518 = vcmp.lt.s32.totalorder %v497, 3
        %vm519 = vcmp.lt.s32.totalorder %v497, 4
        %v520 = vsel %vm516, %v500, %v503
        %v521 = vsel %vm519, %v509, 2102212464
        %v522 = vsel %vm518, %v506, %v521
        %v523 = vsel %vm517, %v520, %v522
        %v524 = vsel %vm516, %v503, %v506
        %v525 = vsel %vm519, %v512, 920167782
        %v526 = vsel %vm518, %v509, %v525
        %v527 = vsel %vm517, %v524, %v526
        %v528 = vsel %vm516, %v506, %v509
        %v529 = vsel %vm519, %v515, 1326507024
        %v530 = vsel %vm518, %v512, %v529
        %v531 = vsel %vm517, %v528, %v530
        %v532 = vshll.u32 %v492, 8
        %v533 = vmul.u32.u64.compose %v532, %v531
        %v534 = vextract.low.u32 %v533
        %v535 = vextract.high.u32 %v533
        %v536 = vmul.u32.u64.compose %v532, %v527
        %v537 = vextract.low.u32 %v536
        %v538 = vextract.high.u32 %v536
        %v539 = vmul.u32 %v532, %v523
        %v540 = vadd.s32 %v535, %v537
        %vm541 = vc.u32 %v535, %v537
        %v542 = vadd.s32 %v538, 1
        %v543 = vsel %vm541, %v542, %v538
        %v544 = vadd.s32 %v539, %v543
        %v545 = vadd.s32 %v544, 536870912
        %v546 = vshrl.u32 %v545, 30
        %v547 = vshll.u32 %v546, 30
        %v548 = vsub.s32 %v544, %v547
        %vm549 = vcmp.lt.s32.totalorder %v548, 0
        %v550 = vsub.s32 0, %v548
        %v551 = vsel %vm549, %v550, %v548
        %v552 = vclz %v551
        %v553 = vsub.s32 %v552, 2
        %vm554 = vcmp.gt.s32.totalorder 0, %v553
        %v555 = vsel %vm554, 0, %v553
        %v556 = vsub.s32 32, %v555
        %v557 = vshll.u32 %v548, %v555
        %v558 = vshrl.u32 %v540, %v556
        %v559 = vor.u32 %v557, %v558
        %v560 = vsub.s32 4294967266, %v555
        %v561 = vadd.s32 %v560, 127
        %v562 = vshll.u32 %v561, 23
        %v563 = vor.u32 4788187, %v562
        %v564 = vand.u32 2147483647, %v563
        %v566 = vcvt.s32.f32 %v559
        %v567 = vmul.f32 %v566, %v564
        %v568 = vxor.u32 %v567, 2147483648
        %v569 = vsel %vm486, %v568, %v567
        %v570 = vsub.s32 4, %v546
        %v571 = vsel %vm486, %v570, %v546
        %v572 = vsel %vm485, %v426, %v569
        %v573 = vsel %vm485, 0, %v571
        %v574 = vcosq.f32.pop %v572
        %v575 = vsinq.f32.pop %v572
        %vm576 = vweird.f32 %v426
        %v577 = vadd.s32 %v573, 3
        %v578 = vand.u32 %v577, 3
        %vm579 = vcmp.lt.s32.totalorder %v578, 2
        %vm580 = vcmp.eq.s32.totalorder %v578, 0
        %v581 = vxor.u32 %v575, 2147483648
        %v582 = vsel %vm580, %v574, %v581
        %vm583 = vcmp.eq.s32.totalorder %v578, 2
        %v584 = vxor.u32 %v574, 2147483648
        %v585 = vsel %vm583, %v584, %v575
        %v586 = vsel %vm579, %v582, %v585
        %v587 = vsel %vm576, nan, %v586
        %v588 = vand.u32 2147483647, %v431
        %vm589 = vcmp.le.f32.partialorder %v588, 0.7853982
        %vm590 = vcmp.lt.s32.totalorder %v431, 0
        %v591 = vand.u32 %v431, 2139095040
        %v592 = vshrl.u32 %v591, 23
        %v593 = vsub.s32 %v592, 127
        %v594 = vand.u32 2147483647, %v431
        %v595 = vand.u32 %v594, 8388607
        %v596 = vor.u32 %v595, 8388608
        %v597 = vsub.s32 0, %v596
        %v598 = vadd.s32 %v593, 1
        %vm599 = vcmp.gt.s32.totalorder %v598, 0
        %v600 = vsel %vm599, %v598, 0
        %v601 = vshrl.u32 %v600, 5
        %v602 = vand.u32 %v600, 31
        %v603 = vsub.s32 32, %v602
        %v604 = vshrl.u32 683565275, %v603
        %v605 = vshll.u32 683565275, %v602
        %v606 = vshrl.u32 2475754826, %v603
        %v607 = vor.u32 %v605, %v606
        %v608 = vshll.u32 2475754826, %v602
        %v609 = vshrl.u32 2131351028, %v603
        %v610 = vor.u32 %v608, %v609
        %v611 = vshll.u32 2131351028, %v602
        %v612 = vshrl.u32 2102212464, %v603
        %v613 = vor.u32 %v611, %v612
        %v614 = vshll.u32 2102212464, %v602
        %v615 = vshrl.u32 920167782, %v603
        %v616 = vor.u32 %v614, %v615
        %v617 = vshll.u32 920167782, %v602
        %v618 = vshrl.u32 1326507024, %v603
        %v619 = vor.u32 %v617, %v618
        %vm620 = vcmp.lt.s32.totalorder %v601, 1
        %vm621 = vcmp.lt.s32.totalorder %v601, 2
        %vm622 = vcmp.lt.s32.totalorder %v601, 3
        %vm623 = vcmp.lt.s32.totalorder %v601, 4
        %v624 = vsel %vm620, %v604, %v607
        %v625 = vsel %vm623, %v613, 2102212464
        %v626 = vsel %vm622, %v610, %v625
        %v627 = vsel %vm621, %v624, %v626
        %v628 = vsel %vm620, %v607, %v610
        %v629 = vsel %vm623, %v616, 920167782
        %v630 = vsel %vm622, %v613, %v629
        %v631 = vsel %vm621, %v628, %v630
        %v632 = vsel %vm620, %v610, %v613
        %v633 = vsel %vm623, %v619, 1326507024
        %v634 = vsel %vm622, %v616, %v633
        %v635 = vsel %vm621, %v632, %v634
        %v636 = vshll.u32 %v596, 8
        %v637 = vmul.u32.u64.compose %v636, %v635
        %v638 = vextract.low.u32 %v637
        %v639 = vextract.high.u32 %v637
        %v640 = vmul.u32.u64.compose %v636, %v631
        %v641 = vextract.low.u32 %v640
        %v642 = vextract.high.u32 %v640
        %v643 = vmul.u32 %v636, %v627
        %v644 = vadd.s32 %v639, %v641
        %vm645 = vc.u32 %v639, %v641
        %v646 = vadd.s32 %v642, 1
        %v647 = vsel %vm645, %v646, %v642
        %v648 = vadd.s32 %v643, %v647
        %v649 = vadd.s32 %v648, 536870912
        %v650 = vshrl.u32 %v649, 30
        %v651 = vshll.u32 %v650, 30
        %v652 = vsub.s32 %v648, %v651
        %vm653 = vcmp.lt.s32.totalorder %v652, 0
        %v654 = vsub.s32 0, %v652
        %v655 = vsel %vm653, %v654, %v652
        %v656 = vclz %v655
        %v657 = vsub.s32 %v656, 2
        %vm658 = vcmp.gt.s32.totalorder 0, %v657
        %v659 = vsel %vm658, 0, %v657
        %v660 = vsub.s32 32, %v659
        %v661 = vshll.u32 %v652, %v659
        %v662 = vshrl.u32 %v644, %v660
        %v663 = vor.u32 %v661, %v662
        %v664 = vsub.s32 4294967266, %v659
        %v665 = vadd.s32 %v664, 127
        %v666 = vshll.u32 %v665, 23
        %v667 = vor.u32 4788187, %v666
        %v668 = vand.u32 2147483647, %v667
        %v670 = vcvt.s32.f32 %v663
        %v671 = vmul.f32 %v670, %v668
        %v672 = vxor.u32 %v671, 2147483648
        %v673 = vsel %vm590, %v672, %v671
        %v674 = vsub.s32 4, %v650
        %v675 = vsel %vm590, %v674, %v650
        %v676 = vsel %vm589, %v431, %v673
        %v677 = vsel %vm589, 0, %v675
        %v678 = vcosq.f32.pop %v676
        %v679 = vsinq.f32.pop %v676
        %vm680 = vweird.f32 %v431
        %v681 = vadd.s32 %v677, 3
        %v682 = vand.u32 %v681, 3
        %vm683 = vcmp.lt.s32.totalorder %v682, 2
        %vm684 = vcmp.eq.s32.totalorder %v682, 0
        %v685 = vxor.u32 %v679, 2147483648
        %v686 = vsel %vm684, %v678, %v685
        %vm687 = vcmp.eq.s32.totalorder %v682, 2
        %v688 = vxor.u32 %v678, 2147483648
        %v689 = vsel %vm687, %v688, %v679
        %v690 = vsel %vm683, %v686, %v689
        %v691 = vsel %vm680, nan, %v690
        %v692 = vand.u32 2147483647, %v436
        %vm693 = vcmp.le.f32.partialorder %v692, 0.7853982
        %vm694 = vcmp.lt.s32.totalorder %v436, 0
        %v695 = vand.u32 %v436, 2139095040
        %v696 = vshrl.u32 %v695, 23
        %v697 = vsub.s32 %v696, 127
        %v698 = vand.u32 2147483647, %v436
        %v699 = vand.u32 %v698, 8388607
        %v700 = vor.u32 %v699, 8388608
        %v701 = vsub.s32 0, %v700
        %v702 = vadd.s32 %v697, 1
        %vm703 = vcmp.gt.s32.totalorder %v702, 0
        %v704 = vsel %vm703, %v702, 0
        %v705 = vshrl.u32 %v704, 5
        %v706 = vand.u32 %v704, 31
        %v707 = vsub.s32 32, %v706
        %v708 = vshrl.u32 683565275, %v707
        %v709 = vshll.u32 683565275, %v706
        %v710 = vshrl.u32 2475754826, %v707
        %v711 = vor.u32 %v709, %v710
        %v712 = vshll.u32 2475754826, %v706
        %v713 = vshrl.u32 2131351028, %v707
        %v714 = vor.u32 %v712, %v713
        %v715 = vshll.u32 2131351028, %v706
        %v716 = vshrl.u32 2102212464, %v707
        %v717 = vor.u32 %v715, %v716
        %v718 = vshll.u32 2102212464, %v706
        %v719 = vshrl.u32 920167782, %v707
        %v720 = vor.u32 %v718, %v719
        %v721 = vshll.u32 920167782, %v706
        %v722 = vshrl.u32 1326507024, %v707
        %v723 = vor.u32 %v721, %v722
        %vm724 = vcmp.lt.s32.totalorder %v705, 1
        %vm725 = vcmp.lt.s32.totalorder %v705, 2
        %vm726 = vcmp.lt.s32.totalorder %v705, 3
        %vm727 = vcmp.lt.s32.totalorder %v705, 4
        %v728 = vsel %vm724, %v708, %v711
        %v729 = vsel %vm727, %v717, 2102212464
        %v730 = vsel %vm726, %v714, %v729
        %v731 = vsel %vm725, %v728, %v730
        %v732 = vsel %vm724, %v711, %v714
        %v733 = vsel %vm727, %v720, 920167782
        %v734 = vsel %vm726, %v717, %v733
        %v735 = vsel %vm725, %v732, %v734
        %v736 = vsel %vm724, %v714, %v717
        %v737 = vsel %vm727, %v723, 1326507024
        %v738 = vsel %vm726, %v720, %v737
        %v739 = vsel %vm725, %v736, %v738
        %v740 = vshll.u32 %v700, 8
        %v741 = vmul.u32.u64.compose %v740, %v739
        %v742 = vextract.low.u32 %v741
        %v743 = vextract.high.u32 %v741
        %v744 = vmul.u32.u64.compose %v740, %v735
        %v745 = vextract.low.u32 %v744
        %v746 = vextract.high.u32 %v744
        %v747 = vmul.u32 %v740, %v731
        %v748 = vadd.s32 %v743, %v745
        %vm749 = vc.u32 %v743, %v745
        %v750 = vadd.s32 %v746, 1
        %v751 = vsel %vm749, %v750, %v746
        %v752 = vadd.s32 %v747, %v751
        %v753 = vadd.s32 %v752, 536870912
        %v754 = vshrl.u32 %v753, 30
        %v755 = vshll.u32 %v754, 30
        %v756 = vsub.s32 %v752, %v755
        %vm757 = vcmp.lt.s32.totalorder %v756, 0
        %v758 = vsub.s32 0, %v756
        %v759 = vsel %vm757, %v758, %v756
        %v760 = vclz %v759
        %v761 = vsub.s32 %v760, 2
        %vm762 = vcmp.gt.s32.totalorder 0, %v761
        %v763 = vsel %vm762, 0, %v761
        %v764 = vsub.s32 32, %v763
        %v765 = vshll.u32 %v756, %v763
        %v766 = vshrl.u32 %v748, %v764
        %v767 = vor.u32 %v765, %v766
        %v768 = vsub.s32 4294967266, %v763
        %v769 = vadd.s32 %v768, 127
        %v770 = vshll.u32 %v769, 23
        %v771 = vor.u32 4788187, %v770
        %v772 = vand.u32 2147483647, %v771
        %v774 = vcvt.s32.f32 %v767
        %v775 = vmul.f32 %v774, %v772
        %v776 = vxor.u32 %v775, 2147483648
        %v777 = vsel %vm694, %v776, %v775
        %v778 = vsub.s32 4, %v754
        %v779 = vsel %vm694, %v778, %v754
        %v780 = vsel %vm693, %v436, %v777
        %v781 = vsel %vm693, 0, %v779
        %v782 = vcosq.f32.pop %v780
        %v783 = vsinq.f32.pop %v780
        %vm784 = vweird.f32 %v436
        %v785 = vadd.s32 %v781, 3
        %v786 = vand.u32 %v785, 3
        %vm787 = vcmp.lt.s32.totalorder %v786, 2
        %vm788 = vcmp.eq.s32.totalorder %v786, 0
        %v789 = vxor.u32 %v783, 2147483648
        %v790 = vsel %vm788, %v782, %v789
        %vm791 = vcmp.eq.s32.totalorder %v786, 2
        %v792 = vxor.u32 %v782, 2147483648
        %v793 = vsel %vm791, %v792, %v783
        %v794 = vsel %vm787, %v790, %v793
        %v795 = vsel %vm784, nan, %v794
        %v796 = vand.u32 2147483647, %v441
        %vm797 = vcmp.le.f32.partialorder %v796, 0.7853982
        %vm798 = vcmp.lt.s32.totalorder %v441, 0
        %v799 = vand.u32 %v441, 2139095040
        %v800 = vshrl.u32 %v799, 23
        %v801 = vsub.s32 %v800, 127
        %v802 = vand.u32 2147483647, %v441
        %v803 = vand.u32 %v802, 8388607
        %v804 = vor.u32 %v803, 8388608
        %v805 = vsub.s32 0, %v804
        %v806 = vadd.s32 %v801, 1
        %vm807 = vcmp.gt.s32.totalorder %v806, 0
        %v808 = vsel %vm807, %v806, 0
        %v809 = vshrl.u32 %v808, 5
        %v810 = vand.u32 %v808, 31
        %v811 = vsub.s32 32, %v810
        %v812 = vshrl.u32 683565275, %v811
        %v813 = vshll.u32 683565275, %v810
        %v814 = vshrl.u32 2475754826, %v811
        %v815 = vor.u32 %v813, %v814
        %v816 = vshll.u32 2475754826, %v810
        %v817 = vshrl.u32 2131351028, %v811
        %v818 = vor.u32 %v816, %v817
        %v819 = vshll.u32 2131351028, %v810
        %v820 = vshrl.u32 2102212464, %v811
        %v821 = vor.u32 %v819, %v820
        %v822 = vshll.u32 2102212464, %v810
        %v823 = vshrl.u32 920167782, %v811
        %v824 = vor.u32 %v822, %v823
        %v825 = vshll.u32 920167782, %v810
        %v826 = vshrl.u32 1326507024, %v811
        %v827 = vor.u32 %v825, %v826
        %vm828 = vcmp.lt.s32.totalorder %v809, 1
        %vm829 = vcmp.lt.s32.totalorder %v809, 2
        %vm830 = vcmp.lt.s32.totalorder %v809, 3
        %vm831 = vcmp.lt.s32.totalorder %v809, 4
        %v832 = vsel %vm828, %v812, %v815
        %v833 = vsel %vm831, %v821, 2102212464
        %v834 = vsel %vm830, %v818, %v833
        %v835 = vsel %vm829, %v832, %v834
        %v836 = vsel %vm828, %v815, %v818
        %v837 = vsel %vm831, %v824, 920167782
        %v838 = vsel %vm830, %v821, %v837
        %v839 = vsel %vm829, %v836, %v838
        %v840 = vsel %vm828, %v818, %v821
        %v841 = vsel %vm831, %v827, 1326507024
        %v842 = vsel %vm830, %v824, %v841
        %v843 = vsel %vm829, %v840, %v842
        %v844 = vshll.u32 %v804, 8
        %v845 = vmul.u32.u64.compose %v844, %v843
        %v846 = vextract.low.u32 %v845
        %v847 = vextract.high.u32 %v845
        %v848 = vmul.u32.u64.compose %v844, %v839
        %v849 = vextract.low.u32 %v848
        %v850 = vextract.high.u32 %v848
        %v851 = vmul.u32 %v844, %v835
        %v852 = vadd.s32 %v847, %v849
        %vm853 = vc.u32 %v847, %v849
        %v854 = vadd.s32 %v850, 1
        %v855 = vsel %vm853, %v854, %v850
        %v856 = vadd.s32 %v851, %v855
        %v857 = vadd.s32 %v856, 536870912
        %v858 = vshrl.u32 %v857, 30
        %v859 = vshll.u32 %v858, 30
        %v860 = vsub.s32 %v856, %v859
        %vm861 = vcmp.lt.s32.totalorder %v860, 0
        %v862 = vsub.s32 0, %v860
        %v863 = vsel %vm861, %v862, %v860
        %v864 = vclz %v863
        %v865 = vsub.s32 %v864, 2
        %vm866 = vcmp.gt.s32.totalorder 0, %v865
        %v867 = vsel %vm866, 0, %v865
        %v868 = vsub.s32 32, %v867
        %v869 = vshll.u32 %v860, %v867
        %v870 = vshrl.u32 %v852, %v868
        %v871 = vor.u32 %v869, %v870
        %v872 = vsub.s32 4294967266, %v867
        %v873 = vadd.s32 %v872, 127
        %v874 = vshll.u32 %v873, 23
        %v875 = vor.u32 4788187, %v874
        %v876 = vand.u32 2147483647, %v875
        %v878 = vcvt.s32.f32 %v871
        %v879 = vmul.f32 %v878, %v876
        %v880 = vxor.u32 %v879, 2147483648
        %v881 = vsel %vm798, %v880, %v879
        %v882 = vsub.s32 4, %v858
        %v883 = vsel %vm798, %v882, %v858
        %v884 = vsel %vm797, %v441, %v881
        %v885 = vsel %vm797, 0, %v883
        %v886 = vcosq.f32.pop %v884
        %v887 = vsinq.f32.pop %v884
        %vm888 = vweird.f32 %v441
        %v889 = vadd.s32 %v885, 3
        %v890 = vand.u32 %v889, 3
        %vm891 = vcmp.lt.s32.totalorder %v890, 2
        %vm892 = vcmp.eq.s32.totalorder %v890, 0
        %v893 = vxor.u32 %v887, 2147483648
        %v894 = vsel %vm892, %v886, %v893
        %vm895 = vcmp.eq.s32.totalorder %v890, 2
        %v896 = vxor.u32 %v886, 2147483648
        %v897 = vsel %vm895, %v896, %v887
        %v898 = vsel %vm891, %v894, %v897
        %v899 = vsel %vm888, nan, %v898
        %v900 = vand.u32 2147483647, %v446
        %vm901 = vcmp.le.f32.partialorder %v900, 0.7853982
        %vm902 = vcmp.lt.s32.totalorder %v446, 0
        %v903 = vand.u32 %v446, 2139095040
        %v904 = vshrl.u32 %v903, 23
        %v905 = vsub.s32 %v904, 127
        %v906 = vand.u32 2147483647, %v446
        %v907 = vand.u32 %v906, 8388607
        %v908 = vor.u32 %v907, 8388608
        %v909 = vsub.s32 0, %v908
        %v910 = vadd.s32 %v905, 1
        %vm911 = vcmp.gt.s32.totalorder %v910, 0
        %v912 = vsel %vm911, %v910, 0
        %v913 = vshrl.u32 %v912, 5
        %v914 = vand.u32 %v912, 31
        %v915 = vsub.s32 32, %v914
        %v916 = vshrl.u32 683565275, %v915
        %v917 = vshll.u32 683565275, %v914
        %v918 = vshrl.u32 2475754826, %v915
        %v919 = vor.u32 %v917, %v918
        %v920 = vshll.u32 2475754826, %v914
        %v921 = vshrl.u32 2131351028, %v915
        %v922 = vor.u32 %v920, %v921
        %v923 = vshll.u32 2131351028, %v914
        %v924 = vshrl.u32 2102212464, %v915
        %v925 = vor.u32 %v923, %v924
        %v926 = vshll.u32 2102212464, %v914
        %v927 = vshrl.u32 920167782, %v915
        %v928 = vor.u32 %v926, %v927
        %v929 = vshll.u32 920167782, %v914
        %v930 = vshrl.u32 1326507024, %v915
        %v931 = vor.u32 %v929, %v930
        %vm932 = vcmp.lt.s32.totalorder %v913, 1
        %vm933 = vcmp.lt.s32.totalorder %v913, 2
        %vm934 = vcmp.lt.s32.totalorder %v913, 3
        %vm935 = vcmp.lt.s32.totalorder %v913, 4
        %v936 = vsel %vm932, %v916, %v919
        %v937 = vsel %vm935, %v925, 2102212464
        %v938 = vsel %vm934, %v922, %v937
        %v939 = vsel %vm933, %v936, %v938
        %v940 = vsel %vm932, %v919, %v922
        %v941 = vsel %vm935, %v928, 920167782
        %v942 = vsel %vm934, %v925, %v941
        %v943 = vsel %vm933, %v940, %v942
        %v944 = vsel %vm932, %v922, %v925
        %v945 = vsel %vm935, %v931, 1326507024
        %v946 = vsel %vm934, %v928, %v945
        %v947 = vsel %vm933, %v944, %v946
        %v948 = vshll.u32 %v908, 8
        %v949 = vmul.u32.u64.compose %v948, %v947
        %v950 = vextract.low.u32 %v949
        %v951 = vextract.high.u32 %v949
        %v952 = vmul.u32.u64.compose %v948, %v943
        %v953 = vextract.low.u32 %v952
        %v954 = vextract.high.u32 %v952
        %v955 = vmul.u32 %v948, %v939
        %v956 = vadd.s32 %v951, %v953
        %vm957 = vc.u32 %v951, %v953
        %v958 = vadd.s32 %v954, 1
        %v959 = vsel %vm957, %v958, %v954
        %v960 = vadd.s32 %v955, %v959
        %v961 = vadd.s32 %v960, 536870912
        %v962 = vshrl.u32 %v961, 30
        %v963 = vshll.u32 %v962, 30
        %v964 = vsub.s32 %v960, %v963
        %vm965 = vcmp.lt.s32.totalorder %v964, 0
        %v966 = vsub.s32 0, %v964
        %v967 = vsel %vm965, %v966, %v964
        %v968 = vclz %v967
        %v969 = vsub.s32 %v968, 2
        %vm970 = vcmp.gt.s32.totalorder 0, %v969
        %v971 = vsel %vm970, 0, %v969
        %v972 = vsub.s32 32, %v971
        %v973 = vshll.u32 %v964, %v971
        %v974 = vshrl.u32 %v956, %v972
        %v975 = vor.u32 %v973, %v974
        %v976 = vsub.s32 4294967266, %v971
        %v977 = vadd.s32 %v976, 127
        %v978 = vshll.u32 %v977, 23
        %v979 = vor.u32 4788187, %v978
        %v980 = vand.u32 2147483647, %v979
        %v982 = vcvt.s32.f32 %v975
        %v983 = vmul.f32 %v982, %v980
        %v984 = vxor.u32 %v983, 2147483648
        %v985 = vsel %vm902, %v984, %v983
        %v986 = vsub.s32 4, %v962
        %v987 = vsel %vm902, %v986, %v962
        %v988 = vsel %vm901, %v446, %v985
        %v989 = vsel %vm901, 0, %v987
        %v990 = vcosq.f32.pop %v988
        %v991 = vsinq.f32.pop %v988
        %vm992 = vweird.f32 %v446
        %v993 = vadd.s32 %v989, 3
        %v994 = vand.u32 %v993, 3
        %vm995 = vcmp.lt.s32.totalorder %v994, 2
        %vm996 = vcmp.eq.s32.totalorder %v994, 0
        %v997 = vxor.u32 %v991, 2147483648
        %v998 = vsel %vm996, %v990, %v997
        %vm999 = vcmp.eq.s32.totalorder %v994, 2
        %v1000 = vxor.u32 %v990, 2147483648
        %v1001 = vsel %vm999, %v1000, %v991
        %v1002 = vsel %vm995, %v998, %v1001
        %v1003 = vsel %vm992, nan, %v1002
        %v1004 = vand.u32 2147483647, %v451
        %vm1005 = vcmp.le.f32.partialorder %v1004, 0.7853982
        %vm1006 = vcmp.lt.s32.totalorder %v451, 0
        %v1007 = vand.u32 %v451, 2139095040
        %v1008 = vshrl.u32 %v1007, 23
        %v1009 = vsub.s32 %v1008, 127
        %v1010 = vand.u32 2147483647, %v451
        %v1011 = vand.u32 %v1010, 8388607
        %v1012 = vor.u32 %v1011, 8388608
        %v1013 = vsub.s32 0, %v1012
        %v1014 = vadd.s32 %v1009, 1
        %vm1015 = vcmp.gt.s32.totalorder %v1014, 0
        %v1016 = vsel %vm1015, %v1014, 0
        %v1017 = vshrl.u32 %v1016, 5
        %v1018 = vand.u32 %v1016, 31
        %v1019 = vsub.s32 32, %v1018
        %v1020 = vshrl.u32 683565275, %v1019
        %v1021 = vshll.u32 683565275, %v1018
        %v1022 = vshrl.u32 2475754826, %v1019
        %v1023 = vor.u32 %v1021, %v1022
        %v1024 = vshll.u32 2475754826, %v1018
        %v1025 = vshrl.u32 2131351028, %v1019
        %v1026 = vor.u32 %v1024, %v1025
        %v1027 = vshll.u32 2131351028, %v1018
        %v1028 = vshrl.u32 2102212464, %v1019
        %v1029 = vor.u32 %v1027, %v1028
        %v1030 = vshll.u32 2102212464, %v1018
        %v1031 = vshrl.u32 920167782, %v1019
        %v1032 = vor.u32 %v1030, %v1031
        %v1033 = vshll.u32 920167782, %v1018
        %v1034 = vshrl.u32 1326507024, %v1019
        %v1035 = vor.u32 %v1033, %v1034
        %vm1036 = vcmp.lt.s32.totalorder %v1017, 1
        %vm1037 = vcmp.lt.s32.totalorder %v1017, 2
        %vm1038 = vcmp.lt.s32.totalorder %v1017, 3
        %vm1039 = vcmp.lt.s32.totalorder %v1017, 4
        %v1040 = vsel %vm1036, %v1020, %v1023
        %v1041 = vsel %vm1039, %v1029, 2102212464
        %v1042 = vsel %vm1038, %v1026, %v1041
        %v1043 = vsel %vm1037, %v1040, %v1042
        %v1044 = vsel %vm1036, %v1023, %v1026
        %v1045 = vsel %vm1039, %v1032, 920167782
        %v1046 = vsel %vm1038, %v1029, %v1045
        %v1047 = vsel %vm1037, %v1044, %v1046
        %v1048 = vsel %vm1036, %v1026, %v1029
        %v1049 = vsel %vm1039, %v1035, 1326507024
        %v1050 = vsel %vm1038, %v1032, %v1049
        %v1051 = vsel %vm1037, %v1048, %v1050
        %v1052 = vshll.u32 %v1012, 8
        %v1053 = vmul.u32.u64.compose %v1052, %v1051
        %v1054 = vextract.low.u32 %v1053
        %v1055 = vextract.high.u32 %v1053
        %v1056 = vmul.u32.u64.compose %v1052, %v1047
        %v1057 = vextract.low.u32 %v1056
        %v1058 = vextract.high.u32 %v1056
        %v1059 = vmul.u32 %v1052, %v1043
        %v1060 = vadd.s32 %v1055, %v1057
        %vm1061 = vc.u32 %v1055, %v1057
        %v1062 = vadd.s32 %v1058, 1
        %v1063 = vsel %vm1061, %v1062, %v1058
        %v1064 = vadd.s32 %v1059, %v1063
        %v1065 = vadd.s32 %v1064, 536870912
        %v1066 = vshrl.u32 %v1065, 30
        %v1067 = vshll.u32 %v1066, 30
        %v1068 = vsub.s32 %v1064, %v1067
        %vm1069 = vcmp.lt.s32.totalorder %v1068, 0
        %v1070 = vsub.s32 0, %v1068
        %v1071 = vsel %vm1069, %v1070, %v1068
        %v1072 = vclz %v1071
        %v1073 = vsub.s32 %v1072, 2
        %vm1074 = vcmp.gt.s32.totalorder 0, %v1073
        %v1075 = vsel %vm1074, 0, %v1073
        %v1076 = vsub.s32 32, %v1075
        %v1077 = vshll.u32 %v1068, %v1075
        %v1078 = vshrl.u32 %v1060, %v1076
        %v1079 = vor.u32 %v1077, %v1078
        %v1080 = vsub.s32 4294967266, %v1075
        %v1081 = vadd.s32 %v1080, 127
        %v1082 = vshll.u32 %v1081, 23
        %v1083 = vor.u32 4788187, %v1082
        %v1084 = vand.u32 2147483647, %v1083
        %v1086 = vcvt.s32.f32 %v1079
        %v1087 = vmul.f32 %v1086, %v1084
        %v1088 = vxor.u32 %v1087, 2147483648
        %v1089 = vsel %vm1006, %v1088, %v1087
        %v1090 = vsub.s32 4, %v1066
        %v1091 = vsel %vm1006, %v1090, %v1066
        %v1092 = vsel %vm1005, %v451, %v1089
        %v1093 = vsel %vm1005, 0, %v1091
        %v1094 = vcosq.f32.pop %v1092
        %v1095 = vsinq.f32.pop %v1092
        %vm1096 = vweird.f32 %v451
        %v1097 = vadd.s32 %v1093, 3
        %v1098 = vand.u32 %v1097, 3
        %vm1099 = vcmp.lt.s32.totalorder %v1098, 2
        %vm1100 = vcmp.eq.s32.totalorder %v1098, 0
        %v1101 = vxor.u32 %v1095, 2147483648
        %v1102 = vsel %vm1100, %v1094, %v1101
        %vm1103 = vcmp.eq.s32.totalorder %v1098, 2
        %v1104 = vxor.u32 %v1094, 2147483648
        %v1105 = vsel %vm1103, %v1104, %v1095
        %v1106 = vsel %vm1099, %v1102, %v1105
        %v1107 = vsel %vm1096, nan, %v1106
        %v1108 = vand.u32 2147483647, %v456
        %vm1109 = vcmp.le.f32.partialorder %v1108, 0.7853982
        %vm1110 = vcmp.lt.s32.totalorder %v456, 0
        %v1111 = vand.u32 %v456, 2139095040
        %v1112 = vshrl.u32 %v1111, 23
        %v1113 = vsub.s32 %v1112, 127
        %v1114 = vand.u32 2147483647, %v456
        %v1115 = vand.u32 %v1114, 8388607
        %v1116 = vor.u32 %v1115, 8388608
        %v1117 = vsub.s32 0, %v1116
        %v1118 = vadd.s32 %v1113, 1
        %vm1119 = vcmp.gt.s32.totalorder %v1118, 0
        %v1120 = vsel %vm1119, %v1118, 0
        %v1121 = vshrl.u32 %v1120, 5
        %v1122 = vand.u32 %v1120, 31
        %v1123 = vsub.s32 32, %v1122
        %v1124 = vshrl.u32 683565275, %v1123
        %v1125 = vshll.u32 683565275, %v1122
        %v1126 = vshrl.u32 2475754826, %v1123
        %v1127 = vor.u32 %v1125, %v1126
        %v1128 = vshll.u32 2475754826, %v1122
        %v1129 = vshrl.u32 2131351028, %v1123
        %v1130 = vor.u32 %v1128, %v1129
        %v1131 = vshll.u32 2131351028, %v1122
        %v1132 = vshrl.u32 2102212464, %v1123
        %v1133 = vor.u32 %v1131, %v1132
        %v1134 = vshll.u32 2102212464, %v1122
        %v1135 = vshrl.u32 920167782, %v1123
        %v1136 = vor.u32 %v1134, %v1135
        %v1137 = vshll.u32 920167782, %v1122
        %v1138 = vshrl.u32 1326507024, %v1123
        %v1139 = vor.u32 %v1137, %v1138
        %vm1140 = vcmp.lt.s32.totalorder %v1121, 1
        %vm1141 = vcmp.lt.s32.totalorder %v1121, 2
        %vm1142 = vcmp.lt.s32.totalorder %v1121, 3
        %vm1143 = vcmp.lt.s32.totalorder %v1121, 4
        %v1144 = vsel %vm1140, %v1124, %v1127
        %v1145 = vsel %vm1143, %v1133, 2102212464
        %v1146 = vsel %vm1142, %v1130, %v1145
        %v1147 = vsel %vm1141, %v1144, %v1146
        %v1148 = vsel %vm1140, %v1127, %v1130
        %v1149 = vsel %vm1143, %v1136, 920167782
        %v1150 = vsel %vm1142, %v1133, %v1149
        %v1151 = vsel %vm1141, %v1148, %v1150
        %v1152 = vsel %vm1140, %v1130, %v1133
        %v1153 = vsel %vm1143, %v1139, 1326507024
        %v1154 = vsel %vm1142, %v1136, %v1153
        %v1155 = vsel %vm1141, %v1152, %v1154
        %v1156 = vshll.u32 %v1116, 8
        %v1157 = vmul.u32.u64.compose %v1156, %v1155
        %v1158 = vextract.low.u32 %v1157
        %v1159 = vextract.high.u32 %v1157
        %v1160 = vmul.u32.u64.compose %v1156, %v1151
        %v1161 = vextract.low.u32 %v1160
        %v1162 = vextract.high.u32 %v1160
        %v1163 = vmul.u32 %v1156, %v1147
        %v1164 = vadd.s32 %v1159, %v1161
        %vm1165 = vc.u32 %v1159, %v1161
        %v1166 = vadd.s32 %v1162, 1
        %v1167 = vsel %vm1165, %v1166, %v1162
        %v1168 = vadd.s32 %v1163, %v1167
        %v1169 = vadd.s32 %v1168, 536870912
        %v1170 = vshrl.u32 %v1169, 30
        %v1171 = vshll.u32 %v1170, 30
        %v1172 = vsub.s32 %v1168, %v1171
        %vm1173 = vcmp.lt.s32.totalorder %v1172, 0
        %v1174 = vsub.s32 0, %v1172
        %v1175 = vsel %vm1173, %v1174, %v1172
        %v1176 = vclz %v1175
        %v1177 = vsub.s32 %v1176, 2
        %vm1178 = vcmp.gt.s32.totalorder 0, %v1177
        %v1179 = vsel %vm1178, 0, %v1177
        %v1180 = vsub.s32 32, %v1179
        %v1181 = vshll.u32 %v1172, %v1179
        %v1182 = vshrl.u32 %v1164, %v1180
        %v1183 = vor.u32 %v1181, %v1182
        %v1184 = vsub.s32 4294967266, %v1179
        %v1185 = vadd.s32 %v1184, 127
        %v1186 = vshll.u32 %v1185, 23
        %v1187 = vor.u32 4788187, %v1186
        %v1188 = vand.u32 2147483647, %v1187
        %v1190 = vcvt.s32.f32 %v1183
        %v1191 = vmul.f32 %v1190, %v1188
        %v1192 = vxor.u32 %v1191, 2147483648
        %v1193 = vsel %vm1110, %v1192, %v1191
        %v1194 = vsub.s32 4, %v1170
        %v1195 = vsel %vm1110, %v1194, %v1170
        %v1196 = vsel %vm1109, %v456, %v1193
        %v1197 = vsel %vm1109, 0, %v1195
        %v1198 = vcosq.f32.pop %v1196
        %v1199 = vsinq.f32.pop %v1196
        %vm1200 = vweird.f32 %v456
        %v1201 = vadd.s32 %v1197, 3
        %v1202 = vand.u32 %v1201, 3
        %vm1203 = vcmp.lt.s32.totalorder %v1202, 2
        %vm1204 = vcmp.eq.s32.totalorder %v1202, 0
        %v1205 = vxor.u32 %v1199, 2147483648
        %v1206 = vsel %vm1204, %v1198, %v1205
        %vm1207 = vcmp.eq.s32.totalorder %v1202, 2
        %v1208 = vxor.u32 %v1198, 2147483648
        %v1209 = vsel %vm1207, %v1208, %v1199
        %v1210 = vsel %vm1203, %v1206, %v1209
        %v1211 = vsel %vm1200, nan, %v1210
        %v1212 = vand.u32 2147483647, %v461
        %vm1213 = vcmp.le.f32.partialorder %v1212, 0.7853982
        %vm1214 = vcmp.lt.s32.totalorder %v461, 0
        %v1215 = vand.u32 %v461, 2139095040
        %v1216 = vshrl.u32 %v1215, 23
        %v1217 = vsub.s32 %v1216, 127
        %v1218 = vand.u32 2147483647, %v461
        %v1219 = vand.u32 %v1218, 8388607
        %v1220 = vor.u32 %v1219, 8388608
        %v1221 = vsub.s32 0, %v1220
        %v1222 = vadd.s32 %v1217, 1
        %vm1223 = vcmp.gt.s32.totalorder %v1222, 0
        %v1224 = vsel %vm1223, %v1222, 0
        %v1225 = vshrl.u32 %v1224, 5
        %v1226 = vand.u32 %v1224, 31
        %v1227 = vsub.s32 32, %v1226
        %v1228 = vshrl.u32 683565275, %v1227
        %v1229 = vshll.u32 683565275, %v1226
        %v1230 = vshrl.u32 2475754826, %v1227
        %v1231 = vor.u32 %v1229, %v1230
        %v1232 = vshll.u32 2475754826, %v1226
        %v1233 = vshrl.u32 2131351028, %v1227
        %v1234 = vor.u32 %v1232, %v1233
        %v1235 = vshll.u32 2131351028, %v1226
        %v1236 = vshrl.u32 2102212464, %v1227
        %v1237 = vor.u32 %v1235, %v1236
        %v1238 = vshll.u32 2102212464, %v1226
        %v1239 = vshrl.u32 920167782, %v1227
        %v1240 = vor.u32 %v1238, %v1239
        %v1241 = vshll.u32 920167782, %v1226
        %v1242 = vshrl.u32 1326507024, %v1227
        %v1243 = vor.u32 %v1241, %v1242
        %vm1244 = vcmp.lt.s32.totalorder %v1225, 1
        %vm1245 = vcmp.lt.s32.totalorder %v1225, 2
        %vm1246 = vcmp.lt.s32.totalorder %v1225, 3
        %vm1247 = vcmp.lt.s32.totalorder %v1225, 4
        %v1248 = vsel %vm1244, %v1228, %v1231
        %v1249 = vsel %vm1247, %v1237, 2102212464
        %v1250 = vsel %vm1246, %v1234, %v1249
        %v1251 = vsel %vm1245, %v1248, %v1250
        %v1252 = vsel %vm1244, %v1231, %v1234
        %v1253 = vsel %vm1247, %v1240, 920167782
        %v1254 = vsel %vm1246, %v1237, %v1253
        %v1255 = vsel %vm1245, %v1252, %v1254
        %v1256 = vsel %vm1244, %v1234, %v1237
        %v1257 = vsel %vm1247, %v1243, 1326507024
        %v1258 = vsel %vm1246, %v1240, %v1257
        %v1259 = vsel %vm1245, %v1256, %v1258
        %v1260 = vshll.u32 %v1220, 8
        %v1261 = vmul.u32.u64.compose %v1260, %v1259
        %v1262 = vextract.low.u32 %v1261
        %v1263 = vextract.high.u32 %v1261
        %v1264 = vmul.u32.u64.compose %v1260, %v1255
        %v1265 = vextract.low.u32 %v1264
        %v1266 = vextract.high.u32 %v1264
        %v1267 = vmul.u32 %v1260, %v1251
        %v1268 = vadd.s32 %v1263, %v1265
        %vm1269 = vc.u32 %v1263, %v1265
        %v1270 = vadd.s32 %v1266, 1
        %v1271 = vsel %vm1269, %v1270, %v1266
        %v1272 = vadd.s32 %v1267, %v1271
        %v1273 = vadd.s32 %v1272, 536870912
        %v1274 = vshrl.u32 %v1273, 30
        %v1275 = vshll.u32 %v1274, 30
        %v1276 = vsub.s32 %v1272, %v1275
        %vm1277 = vcmp.lt.s32.totalorder %v1276, 0
        %v1278 = vsub.s32 0, %v1276
        %v1279 = vsel %vm1277, %v1278, %v1276
        %v1280 = vclz %v1279
        %v1281 = vsub.s32 %v1280, 2
        %vm1282 = vcmp.gt.s32.totalorder 0, %v1281
        %v1283 = vsel %vm1282, 0, %v1281
        %v1284 = vsub.s32 32, %v1283
        %v1285 = vshll.u32 %v1276, %v1283
        %v1286 = vshrl.u32 %v1268, %v1284
        %v1287 = vor.u32 %v1285, %v1286
        %v1288 = vsub.s32 4294967266, %v1283
        %v1289 = vadd.s32 %v1288, 127
        %v1290 = vshll.u32 %v1289, 23
        %v1291 = vor.u32 4788187, %v1290
        %v1292 = vand.u32 2147483647, %v1291
        %v1294 = vcvt.s32.f32 %v1287
        %v1295 = vmul.f32 %v1294, %v1292
        %v1296 = vxor.u32 %v1295, 2147483648
        %v1297 = vsel %vm1214, %v1296, %v1295
        %v1298 = vsub.s32 4, %v1274
        %v1299 = vsel %vm1214, %v1298, %v1274
        %v1300 = vsel %vm1213, %v461, %v1297
        %v1301 = vsel %vm1213, 0, %v1299
        %v1302 = vcosq.f32.pop %v1300
        %v1303 = vsinq.f32.pop %v1300
        %vm1304 = vweird.f32 %v461
        %v1305 = vadd.s32 %v1301, 3
        %v1306 = vand.u32 %v1305, 3
        %vm1307 = vcmp.lt.s32.totalorder %v1306, 2
        %vm1308 = vcmp.eq.s32.totalorder %v1306, 0
        %v1309 = vxor.u32 %v1303, 2147483648
        %v1310 = vsel %vm1308, %v1302, %v1309
        %vm1311 = vcmp.eq.s32.totalorder %v1306, 2
        %v1312 = vxor.u32 %v1302, 2147483648
        %v1313 = vsel %vm1311, %v1312, %v1303
        %v1314 = vsel %vm1307, %v1310, %v1313
        %v1315 = vsel %vm1304, nan, %v1314
        %v1316 = vand.u32 2147483647, %v466
        %vm1317 = vcmp.le.f32.partialorder %v1316, 0.7853982
        %vm1318 = vcmp.lt.s32.totalorder %v466, 0
        %v1319 = vand.u32 %v466, 2139095040
        %v1320 = vshrl.u32 %v1319, 23
        %v1321 = vsub.s32 %v1320, 127
        %v1322 = vand.u32 2147483647, %v466
        %v1323 = vand.u32 %v1322, 8388607
        %v1324 = vor.u32 %v1323, 8388608
        %v1325 = vsub.s32 0, %v1324
        %v1326 = vadd.s32 %v1321, 1
        %vm1327 = vcmp.gt.s32.totalorder %v1326, 0
        %v1328 = vsel %vm1327, %v1326, 0
        %v1329 = vshrl.u32 %v1328, 5
        %v1330 = vand.u32 %v1328, 31
        %v1331 = vsub.s32 32, %v1330
        %v1332 = vshrl.u32 683565275, %v1331
        %v1333 = vshll.u32 683565275, %v1330
        %v1334 = vshrl.u32 2475754826, %v1331
        %v1335 = vor.u32 %v1333, %v1334
        %v1336 = vshll.u32 2475754826, %v1330
        %v1337 = vshrl.u32 2131351028, %v1331
        %v1338 = vor.u32 %v1336, %v1337
        %v1339 = vshll.u32 2131351028, %v1330
        %v1340 = vshrl.u32 2102212464, %v1331
        %v1341 = vor.u32 %v1339, %v1340
        %v1342 = vshll.u32 2102212464, %v1330
        %v1343 = vshrl.u32 920167782, %v1331
        %v1344 = vor.u32 %v1342, %v1343
        %v1345 = vshll.u32 920167782, %v1330
        %v1346 = vshrl.u32 1326507024, %v1331
        %v1347 = vor.u32 %v1345, %v1346
        %vm1348 = vcmp.lt.s32.totalorder %v1329, 1
        %vm1349 = vcmp.lt.s32.totalorder %v1329, 2
        %vm1350 = vcmp.lt.s32.totalorder %v1329, 3
        %vm1351 = vcmp.lt.s32.totalorder %v1329, 4
        %v1352 = vsel %vm1348, %v1332, %v1335
        %v1353 = vsel %vm1351, %v1341, 2102212464
        %v1354 = vsel %vm1350, %v1338, %v1353
        %v1355 = vsel %vm1349, %v1352, %v1354
        %v1356 = vsel %vm1348, %v1335, %v1338
        %v1357 = vsel %vm1351, %v1344, 920167782
        %v1358 = vsel %vm1350, %v1341, %v1357
        %v1359 = vsel %vm1349, %v1356, %v1358
        %v1360 = vsel %vm1348, %v1338, %v1341
        %v1361 = vsel %vm1351, %v1347, 1326507024
        %v1362 = vsel %vm1350, %v1344, %v1361
        %v1363 = vsel %vm1349, %v1360, %v1362
        %v1364 = vshll.u32 %v1324, 8
        %v1365 = vmul.u32.u64.compose %v1364, %v1363
        %v1366 = vextract.low.u32 %v1365
        %v1367 = vextract.high.u32 %v1365
        %v1368 = vmul.u32.u64.compose %v1364, %v1359
        %v1369 = vextract.low.u32 %v1368
        %v1370 = vextract.high.u32 %v1368
        %v1371 = vmul.u32 %v1364, %v1355
        %v1372 = vadd.s32 %v1367, %v1369
        %vm1373 = vc.u32 %v1367, %v1369
        %v1374 = vadd.s32 %v1370, 1
        %v1375 = vsel %vm1373, %v1374, %v1370
        %v1376 = vadd.s32 %v1371, %v1375
        %v1377 = vadd.s32 %v1376, 536870912
        %v1378 = vshrl.u32 %v1377, 30
        %v1379 = vshll.u32 %v1378, 30
        %v1380 = vsub.s32 %v1376, %v1379
        %vm1381 = vcmp.lt.s32.totalorder %v1380, 0
        %v1382 = vsub.s32 0, %v1380
        %v1383 = vsel %vm1381, %v1382, %v1380
        %v1384 = vclz %v1383
        %v1385 = vsub.s32 %v1384, 2
        %vm1386 = vcmp.gt.s32.totalorder 0, %v1385
        %v1387 = vsel %vm1386, 0, %v1385
        %v1388 = vsub.s32 32, %v1387
        %v1389 = vshll.u32 %v1380, %v1387
        %v1390 = vshrl.u32 %v1372, %v1388
        %v1391 = vor.u32 %v1389, %v1390
        %v1392 = vsub.s32 4294967266, %v1387
        %v1393 = vadd.s32 %v1392, 127
        %v1394 = vshll.u32 %v1393, 23
        %v1395 = vor.u32 4788187, %v1394
        %v1396 = vand.u32 2147483647, %v1395
        %v1398 = vcvt.s32.f32 %v1391
        %v1399 = vmul.f32 %v1398, %v1396
        %v1400 = vxor.u32 %v1399, 2147483648
        %v1401 = vsel %vm1318, %v1400, %v1399
        %v1402 = vsub.s32 4, %v1378
        %v1403 = vsel %vm1318, %v1402, %v1378
        %v1404 = vsel %vm1317, %v466, %v1401
        %v1405 = vsel %vm1317, 0, %v1403
        %v1406 = vcosq.f32.pop %v1404
        %v1407 = vsinq.f32.pop %v1404
        %vm1408 = vweird.f32 %v466
        %v1409 = vadd.s32 %v1405, 3
        %v1410 = vand.u32 %v1409, 3
        %vm1411 = vcmp.lt.s32.totalorder %v1410, 2
        %vm1412 = vcmp.eq.s32.totalorder %v1410, 0
        %v1413 = vxor.u32 %v1407, 2147483648
        %v1414 = vsel %vm1412, %v1406, %v1413
        %vm1415 = vcmp.eq.s32.totalorder %v1410, 2
        %v1416 = vxor.u32 %v1406, 2147483648
        %v1417 = vsel %vm1415, %v1416, %v1407
        %v1418 = vsel %vm1411, %v1414, %v1417
        %v1419 = vsel %vm1408, nan, %v1418
        %v1420 = vand.u32 2147483647, %v471
        %vm1421 = vcmp.le.f32.partialorder %v1420, 0.7853982
        %vm1422 = vcmp.lt.s32.totalorder %v471, 0
        %v1423 = vand.u32 %v471, 2139095040
        %v1424 = vshrl.u32 %v1423, 23
        %v1425 = vsub.s32 %v1424, 127
        %v1426 = vand.u32 2147483647, %v471
        %v1427 = vand.u32 %v1426, 8388607
        %v1428 = vor.u32 %v1427, 8388608
        %v1429 = vsub.s32 0, %v1428
        %v1430 = vadd.s32 %v1425, 1
        %vm1431 = vcmp.gt.s32.totalorder %v1430, 0
        %v1432 = vsel %vm1431, %v1430, 0
        %v1433 = vshrl.u32 %v1432, 5
        %v1434 = vand.u32 %v1432, 31
        %v1435 = vsub.s32 32, %v1434
        %v1436 = vshrl.u32 683565275, %v1435
        %v1437 = vshll.u32 683565275, %v1434
        %v1438 = vshrl.u32 2475754826, %v1435
        %v1439 = vor.u32 %v1437, %v1438
        %v1440 = vshll.u32 2475754826, %v1434
        %v1441 = vshrl.u32 2131351028, %v1435
        %v1442 = vor.u32 %v1440, %v1441
        %v1443 = vshll.u32 2131351028, %v1434
        %v1444 = vshrl.u32 2102212464, %v1435
        %v1445 = vor.u32 %v1443, %v1444
        %v1446 = vshll.u32 2102212464, %v1434
        %v1447 = vshrl.u32 920167782, %v1435
        %v1448 = vor.u32 %v1446, %v1447
        %v1449 = vshll.u32 920167782, %v1434
        %v1450 = vshrl.u32 1326507024, %v1435
        %v1451 = vor.u32 %v1449, %v1450
        %vm1452 = vcmp.lt.s32.totalorder %v1433, 1
        %vm1453 = vcmp.lt.s32.totalorder %v1433, 2
        %vm1454 = vcmp.lt.s32.totalorder %v1433, 3
        %vm1455 = vcmp.lt.s32.totalorder %v1433, 4
        %v1456 = vsel %vm1452, %v1436, %v1439
        %v1457 = vsel %vm1455, %v1445, 2102212464
        %v1458 = vsel %vm1454, %v1442, %v1457
        %v1459 = vsel %vm1453, %v1456, %v1458
        %v1460 = vsel %vm1452, %v1439, %v1442
        %v1461 = vsel %vm1455, %v1448, 920167782
        %v1462 = vsel %vm1454, %v1445, %v1461
        %v1463 = vsel %vm1453, %v1460, %v1462
        %v1464 = vsel %vm1452, %v1442, %v1445
        %v1465 = vsel %vm1455, %v1451, 1326507024
        %v1466 = vsel %vm1454, %v1448, %v1465
        %v1467 = vsel %vm1453, %v1464, %v1466
        %v1468 = vshll.u32 %v1428, 8
        %v1469 = vmul.u32.u64.compose %v1468, %v1467
        %v1470 = vextract.low.u32 %v1469
        %v1471 = vextract.high.u32 %v1469
        %v1472 = vmul.u32.u64.compose %v1468, %v1463
        %v1473 = vextract.low.u32 %v1472
        %v1474 = vextract.high.u32 %v1472
        %v1475 = vmul.u32 %v1468, %v1459
        %v1476 = vadd.s32 %v1471, %v1473
        %vm1477 = vc.u32 %v1471, %v1473
        %v1478 = vadd.s32 %v1474, 1
        %v1479 = vsel %vm1477, %v1478, %v1474
        %v1480 = vadd.s32 %v1475, %v1479
        %v1481 = vadd.s32 %v1480, 536870912
        %v1482 = vshrl.u32 %v1481, 30
        %v1483 = vshll.u32 %v1482, 30
        %v1484 = vsub.s32 %v1480, %v1483
        %vm1485 = vcmp.lt.s32.totalorder %v1484, 0
        %v1486 = vsub.s32 0, %v1484
        %v1487 = vsel %vm1485, %v1486, %v1484
        %v1488 = vclz %v1487
        %v1489 = vsub.s32 %v1488, 2
        %vm1490 = vcmp.gt.s32.totalorder 0, %v1489
        %v1491 = vsel %vm1490, 0, %v1489
        %v1492 = vsub.s32 32, %v1491
        %v1493 = vshll.u32 %v1484, %v1491
        %v1494 = vshrl.u32 %v1476, %v1492
        %v1495 = vor.u32 %v1493, %v1494
        %v1496 = vsub.s32 4294967266, %v1491
        %v1497 = vadd.s32 %v1496, 127
        %v1498 = vshll.u32 %v1497, 23
        %v1499 = vor.u32 4788187, %v1498
        %v1500 = vand.u32 2147483647, %v1499
        %v1502 = vcvt.s32.f32 %v1495
        %v1503 = vmul.f32 %v1502, %v1500
        %v1504 = vxor.u32 %v1503, 2147483648
        %v1505 = vsel %vm1422, %v1504, %v1503
        %v1506 = vsub.s32 4, %v1482
        %v1507 = vsel %vm1422, %v1506, %v1482
        %v1508 = vsel %vm1421, %v471, %v1505
        %v1509 = vsel %vm1421, 0, %v1507
        %v1510 = vcosq.f32.pop %v1508
        %v1511 = vsinq.f32.pop %v1508
        %vm1512 = vweird.f32 %v471
        %v1513 = vadd.s32 %v1509, 3
        %v1514 = vand.u32 %v1513, 3
        %vm1515 = vcmp.lt.s32.totalorder %v1514, 2
        %vm1516 = vcmp.eq.s32.totalorder %v1514, 0
        %v1517 = vxor.u32 %v1511, 2147483648
        %v1518 = vsel %vm1516, %v1510, %v1517
        %vm1519 = vcmp.eq.s32.totalorder %v1514, 2
        %v1520 = vxor.u32 %v1510, 2147483648
        %v1521 = vsel %vm1519, %v1520, %v1511
        %v1522 = vsel %vm1515, %v1518, %v1521
        %v1523 = vsel %vm1512, nan, %v1522
        %v1524 = vand.u32 2147483647, %v476
        %vm1525 = vcmp.le.f32.partialorder %v1524, 0.7853982
        %vm1526 = vcmp.lt.s32.totalorder %v476, 0
        %v1527 = vand.u32 %v476, 2139095040
        %v1528 = vshrl.u32 %v1527, 23
        %v1529 = vsub.s32 %v1528, 127
        %v1530 = vand.u32 2147483647, %v476
        %v1531 = vand.u32 %v1530, 8388607
        %v1532 = vor.u32 %v1531, 8388608
        %v1533 = vsub.s32 0, %v1532
        %v1534 = vadd.s32 %v1529, 1
        %vm1535 = vcmp.gt.s32.totalorder %v1534, 0
        %v1536 = vsel %vm1535, %v1534, 0
        %v1537 = vshrl.u32 %v1536, 5
        %v1538 = vand.u32 %v1536, 31
        %v1539 = vsub.s32 32, %v1538
        %v1540 = vshrl.u32 683565275, %v1539
        %v1541 = vshll.u32 683565275, %v1538
        %v1542 = vshrl.u32 2475754826, %v1539
        %v1543 = vor.u32 %v1541, %v1542
        %v1544 = vshll.u32 2475754826, %v1538
        %v1545 = vshrl.u32 2131351028, %v1539
        %v1546 = vor.u32 %v1544, %v1545
        %v1547 = vshll.u32 2131351028, %v1538
        %v1548 = vshrl.u32 2102212464, %v1539
        %v1549 = vor.u32 %v1547, %v1548
        %v1550 = vshll.u32 2102212464, %v1538
        %v1551 = vshrl.u32 920167782, %v1539
        %v1552 = vor.u32 %v1550, %v1551
        %v1553 = vshll.u32 920167782, %v1538
        %v1554 = vshrl.u32 1326507024, %v1539
        %v1555 = vor.u32 %v1553, %v1554
        %vm1556 = vcmp.lt.s32.totalorder %v1537, 1
        %vm1557 = vcmp.lt.s32.totalorder %v1537, 2
        %vm1558 = vcmp.lt.s32.totalorder %v1537, 3
        %vm1559 = vcmp.lt.s32.totalorder %v1537, 4
        %v1560 = vsel %vm1556, %v1540, %v1543
        %v1561 = vsel %vm1559, %v1549, 2102212464
        %v1562 = vsel %vm1558, %v1546, %v1561
        %v1563 = vsel %vm1557, %v1560, %v1562
        %v1564 = vsel %vm1556, %v1543, %v1546
        %v1565 = vsel %vm1559, %v1552, 920167782
        %v1566 = vsel %vm1558, %v1549, %v1565
        %v1567 = vsel %vm1557, %v1564, %v1566
        %v1568 = vsel %vm1556, %v1546, %v1549
        %v1569 = vsel %vm1559, %v1555, 1326507024
        %v1570 = vsel %vm1558, %v1552, %v1569
        %v1571 = vsel %vm1557, %v1568, %v1570
        %v1572 = vshll.u32 %v1532, 8
        %v1573 = vmul.u32.u64.compose %v1572, %v1571
        %v1574 = vextract.low.u32 %v1573
        %v1575 = vextract.high.u32 %v1573
        %v1576 = vmul.u32.u64.compose %v1572, %v1567
        %v1577 = vextract.low.u32 %v1576
        %v1578 = vextract.high.u32 %v1576
        %v1579 = vmul.u32 %v1572, %v1563
        %v1580 = vadd.s32 %v1575, %v1577
        %vm1581 = vc.u32 %v1575, %v1577
        %v1582 = vadd.s32 %v1578, 1
        %v1583 = vsel %vm1581, %v1582, %v1578
        %v1584 = vadd.s32 %v1579, %v1583
        %v1585 = vadd.s32 %v1584, 536870912
        %v1586 = vshrl.u32 %v1585, 30
        %v1587 = vshll.u32 %v1586, 30
        %v1588 = vsub.s32 %v1584, %v1587
        %vm1589 = vcmp.lt.s32.totalorder %v1588, 0
        %v1590 = vsub.s32 0, %v1588
        %v1591 = vsel %vm1589, %v1590, %v1588
        %v1592 = vclz %v1591
        %v1593 = vsub.s32 %v1592, 2
        %vm1594 = vcmp.gt.s32.totalorder 0, %v1593
        %v1595 = vsel %vm1594, 0, %v1593
        %v1596 = vsub.s32 32, %v1595
        %v1597 = vshll.u32 %v1588, %v1595
        %v1598 = vshrl.u32 %v1580, %v1596
        %v1599 = vor.u32 %v1597, %v1598
        %v1600 = vsub.s32 4294967266, %v1595
        %v1601 = vadd.s32 %v1600, 127
        %v1602 = vshll.u32 %v1601, 23
        %v1603 = vor.u32 4788187, %v1602
        %v1604 = vand.u32 2147483647, %v1603
        %v1606 = vcvt.s32.f32 %v1599
        %v1607 = vmul.f32 %v1606, %v1604
        %v1608 = vxor.u32 %v1607, 2147483648
        %v1609 = vsel %vm1526, %v1608, %v1607
        %v1610 = vsub.s32 4, %v1586
        %v1611 = vsel %vm1526, %v1610, %v1586
        %v1612 = vsel %vm1525, %v476, %v1609
        %v1613 = vsel %vm1525, 0, %v1611
        %v1614 = vcosq.f32.pop %v1612
        %v1615 = vsinq.f32.pop %v1612
        %vm1616 = vweird.f32 %v476
        %v1617 = vadd.s32 %v1613, 3
        %v1618 = vand.u32 %v1617, 3
        %vm1619 = vcmp.lt.s32.totalorder %v1618, 2
        %vm1620 = vcmp.eq.s32.totalorder %v1618, 0
        %v1621 = vxor.u32 %v1615, 2147483648
        %v1622 = vsel %vm1620, %v1614, %v1621
        %vm1623 = vcmp.eq.s32.totalorder %v1618, 2
        %v1624 = vxor.u32 %v1614, 2147483648
        %v1625 = vsel %vm1623, %v1624, %v1615
        %v1626 = vsel %vm1619, %v1622, %v1625
        %v1627 = vsel %vm1616, nan, %v1626
        %v1628 = vand.u32 2147483647, %v481
        %vm1629 = vcmp.le.f32.partialorder %v1628, 0.7853982
        %vm1630 = vcmp.lt.s32.totalorder %v481, 0
        %v1631 = vand.u32 %v481, 2139095040
        %v1632 = vshrl.u32 %v1631, 23
        %v1633 = vsub.s32 %v1632, 127
        %v1634 = vand.u32 2147483647, %v481
        %v1635 = vand.u32 %v1634, 8388607
        %v1636 = vor.u32 %v1635, 8388608
        %v1637 = vsub.s32 0, %v1636
        %v1638 = vadd.s32 %v1633, 1
        %vm1639 = vcmp.gt.s32.totalorder %v1638, 0
        %v1640 = vsel %vm1639, %v1638, 0
        %v1641 = vshrl.u32 %v1640, 5
        %v1642 = vand.u32 %v1640, 31
        %v1643 = vsub.s32 32, %v1642
        %v1644 = vshrl.u32 683565275, %v1643
        %v1645 = vshll.u32 683565275, %v1642
        %v1646 = vshrl.u32 2475754826, %v1643
        %v1647 = vor.u32 %v1645, %v1646
        %v1648 = vshll.u32 2475754826, %v1642
        %v1649 = vshrl.u32 2131351028, %v1643
        %v1650 = vor.u32 %v1648, %v1649
        %v1651 = vshll.u32 2131351028, %v1642
        %v1652 = vshrl.u32 2102212464, %v1643
        %v1653 = vor.u32 %v1651, %v1652
        %v1654 = vshll.u32 2102212464, %v1642
        %v1655 = vshrl.u32 920167782, %v1643
        %v1656 = vor.u32 %v1654, %v1655
        %v1657 = vshll.u32 920167782, %v1642
        %v1658 = vshrl.u32 1326507024, %v1643
        %v1659 = vor.u32 %v1657, %v1658
        %vm1660 = vcmp.lt.s32.totalorder %v1641, 1
        %vm1661 = vcmp.lt.s32.totalorder %v1641, 2
        %vm1662 = vcmp.lt.s32.totalorder %v1641, 3
        %vm1663 = vcmp.lt.s32.totalorder %v1641, 4
        %v1664 = vsel %vm1660, %v1644, %v1647
        %v1665 = vsel %vm1663, %v1653, 2102212464
        %v1666 = vsel %vm1662, %v1650, %v1665
        %v1667 = vsel %vm1661, %v1664, %v1666
        %v1668 = vsel %vm1660, %v1647, %v1650
        %v1669 = vsel %vm1663, %v1656, 920167782
        %v1670 = vsel %vm1662, %v1653, %v1669
        %v1671 = vsel %vm1661, %v1668, %v1670
        %v1672 = vsel %vm1660, %v1650, %v1653
        %v1673 = vsel %vm1663, %v1659, 1326507024
        %v1674 = vsel %vm1662, %v1656, %v1673
        %v1675 = vsel %vm1661, %v1672, %v1674
        %v1676 = vshll.u32 %v1636, 8
        %v1677 = vmul.u32.u64.compose %v1676, %v1675
        %v1678 = vextract.low.u32 %v1677
        %v1679 = vextract.high.u32 %v1677
        %v1680 = vmul.u32.u64.compose %v1676, %v1671
        %v1681 = vextract.low.u32 %v1680
        %v1682 = vextract.high.u32 %v1680
        %v1683 = vmul.u32 %v1676, %v1667
        %v1684 = vadd.s32 %v1679, %v1681
        %vm1685 = vc.u32 %v1679, %v1681
        %v1686 = vadd.s32 %v1682, 1
        %v1687 = vsel %vm1685, %v1686, %v1682
        %v1688 = vadd.s32 %v1683, %v1687
        %v1689 = vadd.s32 %v1688, 536870912
        %v1690 = vshrl.u32 %v1689, 30
        %v1691 = vshll.u32 %v1690, 30
        %v1692 = vsub.s32 %v1688, %v1691
        %vm1693 = vcmp.lt.s32.totalorder %v1692, 0
        %v1694 = vsub.s32 0, %v1692
        %v1695 = vsel %vm1693, %v1694, %v1692
        %v1696 = vclz %v1695
        %v1697 = vsub.s32 %v1696, 2
        %vm1698 = vcmp.gt.s32.totalorder 0, %v1697
        %v1699 = vsel %vm1698, 0, %v1697
        %v1700 = vsub.s32 32, %v1699
        %v1701 = vshll.u32 %v1692, %v1699
        %v1702 = vshrl.u32 %v1684, %v1700
        %v1703 = vor.u32 %v1701, %v1702
        %v1704 = vsub.s32 4294967266, %v1699
        %v1705 = vadd.s32 %v1704, 127
        %v1706 = vshll.u32 %v1705, 23
        %v1707 = vor.u32 4788187, %v1706
        %v1708 = vand.u32 2147483647, %v1707
        %v1710 = vcvt.s32.f32 %v1703
        %v1711 = vmul.f32 %v1710, %v1708
        %v1712 = vxor.u32 %v1711, 2147483648
        %v1713 = vsel %vm1630, %v1712, %v1711
        %v1714 = vsub.s32 4, %v1690
        %v1715 = vsel %vm1630, %v1714, %v1690
        %v1716 = vsel %vm1629, %v481, %v1713
        %v1717 = vsel %vm1629, 0, %v1715
        %v1718 = vcosq.f32.pop %v1716
        %v1719 = vsinq.f32.pop %v1716
        %vm1720 = vweird.f32 %v481
        %v1721 = vadd.s32 %v1717, 3
        %v1722 = vand.u32 %v1721, 3
        %vm1723 = vcmp.lt.s32.totalorder %v1722, 2
        %vm1724 = vcmp.eq.s32.totalorder %v1722, 0
        %v1725 = vxor.u32 %v1719, 2147483648
        %v1726 = vsel %vm1724, %v1718, %v1725
        %vm1727 = vcmp.eq.s32.totalorder %v1722, 2
        %v1728 = vxor.u32 %v1718, 2147483648
        %v1729 = vsel %vm1727, %v1728, %v1719
        %v1730 = vsel %vm1723, %v1726, %v1729
        %v1731 = vsel %vm1720, nan, %v1730
        %1733 = vset.pattern.permute.xlu0 0
        %1734 = vperm.xlu0 %1733, %v294
        %v1735 = vpop.permute.xlu0 %1734
        %1738 = vset.pattern.permute.xlu0 0
        %1739 = vperm.xlu0 %1738, %v295
        %v1740 = vpop.permute.xlu0 %1739
        %1743 = vset.pattern.permute.xlu0 0
        %1744 = vperm.xlu0 %1743, %v296
        %v1745 = vpop.permute.xlu0 %1744
        %1748 = vset.pattern.permute.xlu0 0
        %1749 = vperm.xlu0 %1748, %v297
        %v1750 = vpop.permute.xlu0 %1749
        %v1752 = vmul.f32 %v587, %v1735
        %v1753 = vmul.f32 %v691, %v1740
        %v1754 = vmul.f32 %v795, %v1745
        %v1755 = vmul.f32 %v899, %v1750
        %v1756 = vld [vmem:[%s3] sm:$0xff]
        %v1757 = vld [vmem:[%s3 + $0x8] sm:$0xff]
        %v1758 = vld [vmem:[%s3 + $0x10] sm:$0xff]
        %v1759 = vld [vmem:[%s3 + $0x18] sm:$0xff]
        %v1760 = vld [vmem:[%s3 + $0x20] sm:$0xff]
        %v1761 = vld [vmem:[%s3 + $0x28] sm:$0xff]
        %v1762 = vld [vmem:[%s3 + $0x30] sm:$0xff]
        %v1763 = vld [vmem:[%s3 + $0x38] sm:$0xff]
        %1765 = vset.pattern.permute.xlu0 0
        %1766 = vperm.xlu0 %1765, %v298
        %v1767 = vpop.permute.xlu0 %1766
        %1770 = vset.pattern.permute.xlu0 0
        %1771 = vperm.xlu0 %1770, %v299
        %v1772 = vpop.permute.xlu0 %1771
        %1775 = vset.pattern.permute.xlu0 0
        %1776 = vperm.xlu0 %1775, %v300
        %v1777 = vpop.permute.xlu0 %1776
        %1780 = vset.pattern.permute.xlu0 0
        %1781 = vperm.xlu0 %1780, %v301
        %v1782 = vpop.permute.xlu0 %1781
        %vm1784 = vcmask 261120
        %v1786 = vsel %vm1784, %v1756, 0
        %v1789 = vsel %vm1784, %v1757, 0
        %v1792 = vsel %vm1784, %v1758, 0
        %v1795 = vsel %vm1784, %v1759, 0
        %1797 = vmatprep.subr.mxu0 0.0
        %1798 = vmatpush1.msra.mxu0 %v1752
        %1799 = vmatprep.subr.mxu0 0.0
        %1800 = vmatpush1.msra.mxu0 %v1753
        %1801 = vmatprep.subr.mxu0 0.0
        %1802 = vmatpush1.msra.mxu0 %v1754
        %1803 = vmatprep.subr.mxu0 0.0
        %1804 = vmatpush1.msra.mxu0 %v1755
        %1805 = vmatprep.subr.mxu0 0.0
        %1806 = vmatpush1.msra.mxu0 0.0
        %1807 = vmatprep.subr.mxu0 0.0
        %1808 = vmatpush1.msra.mxu0 0.0
        %1809 = vmatprep.subr.mxu0 0.0
        %1810 = vmatpush1.msra.mxu0 0.0
        %1811 = vmatprep.subr.mxu0 0.0
        %1812 = vmatpush1.msra.mxu0 0.0
        %1813 = vmatprep.subr.mxu0 0.0
        %1814 = vmatpush1.msra.mxu0 0.0
        %1815 = vmatprep.subr.mxu0 0.0
        %1816 = vmatpush1.msra.mxu0 0.0
        %1817 = vmatprep.subr.mxu0 0.0
        %1818 = vmatpush1.msra.mxu0 0.0
        %1819 = vmatprep.subr.mxu0 0.0
        %1820 = vmatpush1.msra.mxu0 0.0
        %1821 = vmatprep.subr.mxu0 0.0
        %1822 = vmatpush1.msra.mxu0 0.0
        %1823 = vmatprep.subr.mxu0 0.0
        %1824 = vmatpush1.msra.mxu0 0.0
        %1825 = vmatprep.subr.mxu0 0.0
        %1826 = vmatpush1.msra.mxu0 0.0
        %1827 = vmatprep.subr.mxu0 0.0
        %1828 = vmatpush1.msra.mxu0 0.0
        %1829 = vmatprep.subr.mxu0 0.0
        %1830 = vmatpush1.msra.mxu0 0.0
        %1831 = vmatprep.subr.mxu0 0.0
        %1832 = vmatpush1.msra.mxu0 0.0
        %1833 = vmatprep.subr.mxu0 0.0
        %1834 = vmatpush1.msra.mxu0 0.0
        %1835 = vmatprep.subr.mxu0 0.0
        %1836 = vmatpush1.msra.mxu0 0.0
        %1837 = vmatprep.subr.mxu0 0.0
        %1838 = vmatpush1.msra.mxu0 0.0
        %1839 = vmatprep.subr.mxu0 0.0
        %1840 = vmatpush1.msra.mxu0 0.0
        %1841 = vmatprep.subr.mxu0 0.0
        %1842 = vmatpush1.msra.mxu0 0.0
        %1843 = vmatprep.subr.mxu0 0.0
        %1844 = vmatpush1.msra.mxu0 0.0
        %1845 = vmatprep.subr.mxu0 0.0
        %1846 = vmatpush1.msra.mxu0 0.0
        %1847 = vmatprep.subr.mxu0 0.0
        %1848 = vmatpush1.msra.mxu0 0.0
        %1849 = vmatprep.subr.mxu0 0.0
        %1850 = vmatpush1.msra.mxu0 0.0
        %1851 = vmatprep.subr.mxu0 0.0
        %1852 = vmatpush1.msra.mxu0 0.0
        %1853 = vmatprep.subr.mxu0 0.0
        %1854 = vmatpush1.msra.mxu0 0.0
        %1855 = vmatprep.subr.mxu0 0.0
        %1856 = vmatpush1.msra.mxu0 0.0
        %1857 = vmatprep.subr.mxu0 0.0
        %1858 = vmatpush1.msra.mxu0 0.0
        %1859 = vmatprep.subr.mxu0 0.0
        %1860 = vmatpush1.msra.mxu0 0.0
        %1861 = vmatprep.mubr.f32.mxu0 0.0
        %1862 = vmatmul.mubr.f32.gmra.mrb[0].mxu0 %v1786
        %v1863 = vpop.f32.mrb[0].mxu0
        %v1864 = vadd.f32 %v1767, %v1863
        %v1865 = vpop.f32.mrb[0].mxu0
        %1866 = vmatprep.mubr.f32.mxu0 0.0
        %1867 = vmatmul.mubr.f32.gmra.mrb[0].mxu0 %v1789
        %v1868 = vpop.f32.mrb[0].mxu0
        %v1869 = vadd.f32 %v1772, %v1868
        %v1870 = vpop.f32.mrb[0].mxu0
        %1871 = vmatprep.mubr.f32.mxu0 0.0
        %1872 = vmatmul.mubr.f32.gmra.mrb[0].mxu0 %v1792
        %v1873 = vpop.f32.mrb[0].mxu0
        %v1874 = vadd.f32 %v1777, %v1873
        %v1875 = vpop.f32.mrb[0].mxu0
        %1876 = vmatprep.mubr.f32.mxu0 0.0
        %1877 = vmatmul.mubr.f32.gmra.mrb[0].mxu0 %v1795
        %v1878 = vpop.f32.mrb[0].mxu0
        %v1879 = vadd.f32 %v1782, %v1878
        %v1880 = vpop.f32.mrb[0].mxu0
        %1881 = vdwg.mxu0
        %v1882 = vmul.f32 %v1003, %v1864
        %v1883 = vmul.f32 %v1107, %v1869
        %v1884 = vmul.f32 %v1211, %v1874
        %v1885 = vmul.f32 %v1315, %v1879
        %1887 = vset.pattern.permute.xlu0 0
        %1888 = vperm.xlu0 %1887, %v302
        %v1889 = vpop.permute.xlu0 %1888
        %1892 = vset.pattern.permute.xlu0 0
        %1893 = vperm.xlu0 %1892, %v303
        %v1894 = vpop.permute.xlu0 %1893
        %1897 = vset.pattern.permute.xlu0 0
        %1898 = vperm.xlu0 %1897, %v304
        %v1899 = vpop.permute.xlu0 %1898
        %1902 = vset.pattern.permute.xlu0 0
        %1903 = vperm.xlu0 %1902, %v305
        %v1904 = vpop.permute.xlu0 %1903
        %v1907 = vsel %vm1784, %v1760, 0
        %v1910 = vsel %vm1784, %v1761, 0
        %v1913 = vsel %vm1784, %v1762, 0
        %v1916 = vsel %vm1784, %v1763, 0
        %1918 = vmatprep.subr.mxu0 0.0
        %1919 = vmatpush1.msra.mxu0 %v1882
        %1920 = vmatprep.subr.mxu0 0.0
        %1921 = vmatpush1.msra.mxu0 %v1883
        %1922 = vmatprep.subr.mxu0 0.0
        %1923 = vmatpush1.msra.mxu0 %v1884
        %1924 = vmatprep.subr.mxu0 0.0
        %1925 = vmatpush1.msra.mxu0 %v1885
        %1926 = vmatprep.subr.mxu0 0.0
        %1927 = vmatpush1.msra.mxu0 0.0
        %1928 = vmatprep.subr.mxu0 0.0
        %1929 = vmatpush1.msra.mxu0 0.0
        %1930 = vmatprep.subr.mxu0 0.0
        %1931 = vmatpush1.msra.mxu0 0.0
        %1932 = vmatprep.subr.mxu0 0.0
        %1933 = vmatpush1.msra.mxu0 0.0
        %1934 = vmatprep.subr.mxu0 0.0
        %1935 = vmatpush1.msra.mxu0 0.0
        %1936 = vmatprep.subr.mxu0 0.0
        %1937 = vmatpush1.msra.mxu0 0.0
        %1938 = vmatprep.subr.mxu0 0.0
        %1939 = vmatpush1.msra.mxu0 0.0
        %1940 = vmatprep.subr.mxu0 0.0
        %1941 = vmatpush1.msra.mxu0 0.0
        %1942 = vmatprep.subr.mxu0 0.0
        %1943 = vmatpush1.msra.mxu0 0.0
        %1944 = vmatprep.subr.mxu0 0.0
        %1945 = vmatpush1.msra.mxu0 0.0
        %1946 = vmatprep.subr.mxu0 0.0
        %1947 = vmatpush1.msra.mxu0 0.0
        %1948 = vmatprep.subr.mxu0 0.0
        %1949 = vmatpush1.msra.mxu0 0.0
        %1950 = vmatprep.subr.mxu0 0.0
        %1951 = vmatpush1.msra.mxu0 0.0
        %1952 = vmatprep.subr.mxu0 0.0
        %1953 = vmatpush1.msra.mxu0 0.0
        %1954 = vmatprep.subr.mxu0 0.0
        %1955 = vmatpush1.msra.mxu0 0.0
        %1956 = vmatprep.subr.mxu0 0.0
        %1957 = vmatpush1.msra.mxu0 0.0
        %1958 = vmatprep.subr.mxu0 0.0
        %1959 = vmatpush1.msra.mxu0 0.0
        %1960 = vmatprep.subr.mxu0 0.0
        %1961 = vmatpush1.msra.mxu0 0.0
        %1962 = vmatprep.subr.mxu0 0.0
        %1963 = vmatpush1.msra.mxu0 0.0
        %1964 = vmatprep.subr.mxu0 0.0
        %1965 = vmatpush1.msra.mxu0 0.0
        %1966 = vmatprep.subr.mxu0 0.0
        %1967 = vmatpush1.msra.mxu0 0.0
        %1968 = vmatprep.subr.mxu0 0.0
        %1969 = vmatpush1.msra.mxu0 0.0
        %1970 = vmatprep.subr.mxu0 0.0
        %1971 = vmatpush1.msra.mxu0 0.0
        %1972 = vmatprep.subr.mxu0 0.0
        %1973 = vmatpush1.msra.mxu0 0.0
        %1974 = vmatprep.subr.mxu0 0.0
        %1975 = vmatpush1.msra.mxu0 0.0
        %1976 = vmatprep.subr.mxu0 0.0
        %1977 = vmatpush1.msra.mxu0 0.0
        %1978 = vmatprep.subr.mxu0 0.0
        %1979 = vmatpush1.msra.mxu0 0.0
        %1980 = vmatprep.subr.mxu0 0.0
        %1981 = vmatpush1.msra.mxu0 0.0
        %1982 = vmatprep.mubr.f32.mxu0 0.0
        %1983 = vmatmul.mubr.f32.gmra.mrb[0].mxu0 %v1907
        %v1984 = vpop.f32.mrb[0].mxu0
        %v1985 = vadd.f32 %v1889, %v1984
        %v1986 = vpop.f32.mrb[0].mxu0
        %1987 = vmatprep.mubr.f32.mxu0 0.0
        %1988 = vmatmul.mubr.f32.gmra.mrb[0].mxu0 %v1910
        %v1989 = vpop.f32.mrb[0].mxu0
        %v1990 = vadd.f32 %v1894, %v1989
        %v1991 = vpop.f32.mrb[0].mxu0
        %1992 = vmatprep.mubr.f32.mxu0 0.0
        %1993 = vmatmul.mubr.f32.gmra.mrb[0].mxu0 %v1913
        %v1994 = vpop.f32.mrb[0].mxu0
        %v1995 = vadd.f32 %v1899, %v1994
        %v1996 = vpop.f32.mrb[0].mxu0
        %1997 = vmatprep.mubr.f32.mxu0 0.0
        %1998 = vmatmul.mubr.f32.gmra.mrb[0].mxu0 %v1916
        %v1999 = vpop.f32.mrb[0].mxu0
        %v2000 = vadd.f32 %v1904, %v1999
        %v2001 = vpop.f32.mrb[0].mxu0
        %2002 = vdwg.mxu0
        %v2003 = vmul.f32 %v1419, %v1985
        %v2004 = vmul.f32 %v1523, %v1990
        %v2005 = vmul.f32 %v1627, %v1995
        %v2006 = vmul.f32 %v1731, %v2000
        %v2007 = vld [vmem:[%s4] sm:$0x1]
        %v2008 = vld [vmem:[#allocation2] sm:$0x1]
        %2010 = vset.pattern.permute.xlu0 0
        %2011 = vperm.xlu0 %2010, %v2008
        %v2012 = vpop.permute.xlu0 %2011
        %v2014 = vlaneseq
        %v2015 = vshrl.u32 %v2014, 7
        %v2016 = vsub.s32 0, %v2015
        %v2017 = vrot.slane %v2012, %v2016
        %v2019 = vsel %vm1784, %v2007, 0
        %2021 = vmatprep.subr.mxu0 0.0
        %2022 = vmatpush1.msra.mxu0 %v2003
        %2023 = vmatprep.subr.mxu0 0.0
        %2024 = vmatpush1.msra.mxu0 %v2004
        %2025 = vmatprep.subr.mxu0 0.0
        %2026 = vmatpush1.msra.mxu0 %v2005
        %2027 = vmatprep.subr.mxu0 0.0
        %2028 = vmatpush1.msra.mxu0 %v2006
        %2029 = vmatprep.subr.mxu0 0.0
        %2030 = vmatpush1.msra.mxu0 0.0
        %2031 = vmatprep.subr.mxu0 0.0
        %2032 = vmatpush1.msra.mxu0 0.0
        %2033 = vmatprep.subr.mxu0 0.0
        %2034 = vmatpush1.msra.mxu0 0.0
        %2035 = vmatprep.subr.mxu0 0.0
        %2036 = vmatpush1.msra.mxu0 0.0
        %2037 = vmatprep.subr.mxu0 0.0
        %2038 = vmatpush1.msra.mxu0 0.0
        %2039 = vmatprep.subr.mxu0 0.0
        %2040 = vmatpush1.msra.mxu0 0.0
        %2041 = vmatprep.subr.mxu0 0.0
        %2042 = vmatpush1.msra.mxu0 0.0
        %2043 = vmatprep.subr.mxu0 0.0
        %2044 = vmatpush1.msra.mxu0 0.0
        %2045 = vmatprep.subr.mxu0 0.0
        %2046 = vmatpush1.msra.mxu0 0.0
        %2047 = vmatprep.subr.mxu0 0.0
        %2048 = vmatpush1.msra.mxu0 0.0
        %2049 = vmatprep.subr.mxu0 0.0
        %2050 = vmatpush1.msra.mxu0 0.0
        %2051 = vmatprep.subr.mxu0 0.0
        %2052 = vmatpush1.msra.mxu0 0.0
        %2053 = vmatprep.subr.mxu0 0.0
        %2054 = vmatpush1.msra.mxu0 0.0
        %2055 = vmatprep.subr.mxu0 0.0
        %2056 = vmatpush1.msra.mxu0 0.0
        %2057 = vmatprep.subr.mxu0 0.0
        %2058 = vmatpush1.msra.mxu0 0.0
        %2059 = vmatprep.subr.mxu0 0.0
        %2060 = vmatpush1.msra.mxu0 0.0
        %2061 = vmatprep.subr.mxu0 0.0
        %2062 = vmatpush1.msra.mxu0 0.0
        %2063 = vmatprep.subr.mxu0 0.0
        %2064 = vmatpush1.msra.mxu0 0.0
        %2065 = vmatprep.subr.mxu0 0.0
        %2066 = vmatpush1.msra.mxu0 0.0
        %2067 = vmatprep.subr.mxu0 0.0
        %2068 = vmatpush1.msra.mxu0 0.0
        %2069 = vmatprep.subr.mxu0 0.0
        %2070 = vmatpush1.msra.mxu0 0.0
        %2071 = vmatprep.subr.mxu0 0.0
        %2072 = vmatpush1.msra.mxu0 0.0
        %2073 = vmatprep.subr.mxu0 0.0
        %2074 = vmatpush1.msra.mxu0 0.0
        %2075 = vmatprep.subr.mxu0 0.0
        %2076 = vmatpush1.msra.mxu0 0.0
        %2077 = vmatprep.subr.mxu0 0.0
        %2078 = vmatpush1.msra.mxu0 0.0
        %2079 = vmatprep.subr.mxu0 0.0
        %2080 = vmatpush1.msra.mxu0 0.0
        %2081 = vmatprep.subr.mxu0 0.0
        %2082 = vmatpush1.msra.mxu0 0.0
        %2083 = vmatprep.subr.mxu0 0.0
        %2084 = vmatpush1.msra.mxu0 0.0
        %2085 = vmatprep.mubr.f32.mxu0 0.0
        %2086 = vmatmul.mubr.f32.gmra.mrb[0].mxu0 %v2019
        %v2087 = vpop.f32.mrb[0].mxu0
        %v2088 = vadd.f32 %v2017, %v2087
        %v2089 = vpop.f32.mrb[0].mxu0
        %2090 = vdwg.mxu0
        %2091 = vst [vmem:[%s280] sm:$0x1] %v2088
        %s2092 = sand.u32 %s182, 1
        %s2093 = scalar_lea.sflag [#allocation4], %s2092
        %s2094 = sand.u32 %s182, 1
        %s2095 = scalar_lea.vmem [#allocation3], %s2094
        // Predicated region
        $region45: #{tpu_custom_call.1} parent=43 // pred_check
          %p2096 = pneg %p192
        $region46: #{tpu_custom_call.1} parent=43 // pred_check_branch
          %2098 = sbr.rel (%p2096) target = $region48
        $region47: #{tpu_custom_call.1} parent=43 // pred_region
          %s2100 = ssub.s32 16, 16
          %2101 = vsyncadd %s2093, %s2100
          %s2102 = sadd.s32 %s27, %s26
          %s2103 = smul.addr %s2102, 16
          %s2104 = scalar_lea.hbm %s6, %s2103
          %s2106 = sshll.u32 %s2095, 4
          %s2107 = int_to_ptr.vmem [resolvable:$true] %s2106
          %2109 = dma.vmem_to_hbm [thread:$0]  %s2107, 16, %s2104, %s2093
        $region48: #{tpu_custom_call.1} parent=43 // pred_fallthru
          _
      $region44: #{tpu_custom_call.1} parent=5 // pred_fallthru
        _
      %p2110 = scmp.le.s32.totalorder 2, %s17
      // Predicated region
      $region49: #{tpu_custom_call.1} parent=5 // pred_check
        %p2111 = pneg %p2110
      $region50: #{tpu_custom_call.1} parent=5 // pred_check_branch
        %2113 = sbr.rel (%p2111) target = $region52
      $region51: #{tpu_custom_call.1} parent=5 // pred_region
        %s2114 = ssub.s32 %s17, 2
        // Predicated region
        $region53: #{tpu_custom_call.1} parent=51 // pred_check
          %p2115 = pneg %p198
        $region54: #{tpu_custom_call.1} parent=51 // pred_check_branch
          %2117 = sbr.rel (%p2115) target = $region56
        $region55: #{tpu_custom_call.1} parent=51 // pred_region
          %s2118 = sand.u32 %s183, 1
          %s2119 = scalar_lea.sflag [#allocation4], %s2118
          %s2120 = sand.u32 %s183, 1
          %s2121 = scalar_lea.vmem [#allocation3], %s2120
          %2122 = dma.done %s2119, 16
        $region56: #{tpu_custom_call.1} parent=51 // pred_fallthru
          _
      $region52: #{tpu_custom_call.1} parent=5 // pred_fallthru
        _
    $region6: #{tpu_custom_call.1} parent=1 // loop_footer
      %s21 = sadd.s32 1, %s17
    $region7: #{tpu_custom_call.1} parent=1 // loop_footer_branch
      %16 = sbr.rel target = $region3
    $region8: #{tpu_custom_call.1} parent=1 // loop_exit
      _
    %2123 = vsyncpa [#allocation4], 1
    %s2124 = scalar_lea.sflag [#allocation4], 1
    %2125 = vsyncpa %s2124, 1

</llo_original>
